<compile_context>
chip_gen: v6e
topology: v6e:2x2x1
jax: 0.10.0
libtpu: 0.0.40
codegen_flags: <defaults>
</compile_context>

<pallas_src>
import jax
import jax.numpy as jnp
from jax import lax
from jax.experimental import pallas as pl
from jax.experimental.pallas import tpu as pltpu


def _round_up(x, m):
    return (x + m - 1) // m * m


def _make_rnn_seq_kernel(h_pad, t_chunk, t_total):
    """Kernel factory closing over padded hidden width, chunk size and true T."""
    t_padded = _round_up(t_total, t_chunk)

    def kernel(x_ref, h0_hbm, wx_hbm, wh_hbm, b_hbm,      # inputs
               out_ref, hT_ref,                           # outputs
               wx_v, wh_v, b_v, h_v, sem):                # scratch
        c = pl.program_id(0)
        nc = pl.num_programs(0)

        # One-time HBM->VMEM copies of the resident operands (single-buffered).
        @pl.when(c == 0)
        def _():
            copies = [
                pltpu.make_async_copy(wx_hbm, wx_v, sem.at[0]),
                pltpu.make_async_copy(wh_hbm, wh_v, sem.at[1]),
                pltpu.make_async_copy(b_hbm, b_v, sem.at[2]),
                pltpu.make_async_copy(h0_hbm, h_v, sem.at[3]),
            ]
            for cp in copies:
                cp.start()
            for cp in copies:
                cp.wait()

        t0 = c * t_chunk

        def step(i, h):
            x = x_ref[i]                                   # (Bp, Ip) bf16
            # Fused i2h/i2o matmul: concat(x, h) @ [W_i2h | W_i2o]
            #                     == x @ W_x + h @ W_h   (weights split by rows)
            z = jnp.dot(x, wx_v[...], preferred_element_type=jnp.float32)
            z = z + jnp.dot(h.astype(jnp.bfloat16), wh_v[...],
                            preferred_element_type=jnp.float32)
            z = z + b_v[...]                               # bias bcast over batch

            new_h = z[:, :h_pad]                           # padded hidden lanes = 0
            logits = z[:, h_pad:]                          # padded logit lanes = -1e30

            # log_softmax along feature axis (padded lanes contribute exp(-inf)=0).
            m = jnp.max(logits, axis=-1, keepdims=True)
            shifted = logits - m
            lse = jnp.log(jnp.sum(jnp.exp(shifted), axis=-1, keepdims=True))
            out_ref[i] = (shifted - lse).astype(out_ref.dtype)

            if t_padded != t_total:
                # Keep the hidden state frozen on padded tail timesteps.
                new_h = jnp.where(t0 + i < t_total, new_h, h)
            return new_h

        h_final = lax.fori_loop(0, t_chunk, step, h_v[...], unroll=True)
        h_v[...] = h_final                                 # carry across chunks

        @pl.when(c == nc - 1)
        def _():
            hT_ref[...] = h_final.astype(hT_ref.dtype)

    return kernel


def prepare_params(w_i2h, b_i2h, w_i2o, b_i2o, input_size):
    """Fuse + pad the weights ONCE at init (hoisted out of the per-call path).

    w_i2h: (input_size + hidden_size, hidden_size)   [pre-transposed vs torch]
    w_i2o: (input_size + hidden_size, output_size)   [pre-transposed vs torch]
    Returns (wx_p, wh_p, b_p) where wx_p/wh_p are bf16 and b_p is f32 with a
    -1e30 mask on padded logit lanes (dtype-aware: safe in f32/bf16).
    """
    bf16 = jnp.bfloat16
    f32 = jnp.float32
    I = input_size
    H = w_i2h.shape[1]
    O = w_i2o.shape[1]
    Ip, Hp, Op = _round_up(I, 128), _round_up(H, 128), _round_up(O, 128)

    wx = jnp.zeros((Ip, Hp + Op), bf16)
    wx = wx.at[:I, :H].set(w_i2h[:I].astype(bf16))
    wx = wx.at[:I, Hp:Hp + O].set(w_i2o[:I].astype(bf16))

    wh = jnp.zeros((Hp, Hp + Op), bf16)
    wh = wh.at[:H, :H].set(w_i2h[I:].astype(bf16))
    wh = wh.at[:H, Hp:Hp + O].set(w_i2o[I:].astype(bf16))

    b = jnp.zeros((1, Hp + Op), f32)
    b = b.at[0, :H].set(b_i2h.astype(f32))
    b = b.at[0, Hp:Hp + O].set(b_i2o.astype(f32))
    b = b.at[0, Hp + O:].set(jnp.float32(-1e30))           # mask padded logit lanes
    return wx, wh, b


def rnn_sequence(xs, h0, wx_p, wh_p, b_p, *, output_size, time_chunk=8):
    """Apply the RNN cell over a sequence inside a single Pallas call.

    xs: (T, B, input_size), h0: (B, hidden_size); weights from prepare_params().
    Returns (log_softmax outputs (T, B, output_size), final hidden (B, hidden)).
    """
    T, B, I = xs.shape
    H = h0.shape[1]
    O = output_size
    f32 = jnp.float32
    bf16 = jnp.bfloat16

    Ip = wx_p.shape[0]
    Hp = wh_p.shape[0]
    Op = wx_p.shape[1] - Hp
    Bp = _round_up(B, 8)

    Tc = max(1, min(time_chunk, T))
    Tp = _round_up(T, Tc)
    n_chunks = Tp // Tc

    # TODO(synk): stream xs unpadded (full-array block on the last two dims) and
    # pad into a VMEM staging tile in-kernel to avoid HBM inflation when B,I
    # are far below (8,128); also add a leading batch-tile "parallel" grid axis
    # (weights in VMEM_SHARED) to occupy the second TensorCore on v7x.
    xs_p = jnp.zeros((Tp, Bp, Ip), bf16).at[:T, :B, :I].set(xs.astype(bf16))
    h0_p = jnp.zeros((Bp, Hp), f32).at[:B, :H].set(h0.astype(f32))

    # Explicit scoped-VMEM budget from the actual footprint (2x headroom,
    # clamped below v7x's 64 MiB physical VMEM).
    resident = (wx_p.size + wh_p.size) * 2 + b_p.size * 4 + Bp * Hp * 4
    streamed = 2 * Tc * Bp * Ip * 2 + 2 * Tc * Bp * Op * 4 + Bp * Hp * 4
    vmem_limit = int(min(60 * 2**20, max(32 * 2**20, 2 * (resident + streamed))))

    out_p, hT_p = pl.pallas_call(
        _make_rnn_seq_kernel(Hp, Tc, T),
        out_shape=(
            jax.ShapeDtypeStruct((Tp, Bp, Op), f32),      # per-step log-softmax
            jax.ShapeDtypeStruct((Bp, Hp), f32),          # final hidden
        ),
        grid_spec=pltpu.PrefetchScalarGridSpec(
            num_scalar_prefetch=0,
            grid=(n_chunks,),
            in_specs=[
                pl.BlockSpec((Tc, Bp, Ip), lambda c: (c, 0, 0)),  # x chunk (pipelined)
                pl.BlockSpec(memory_space=pl.ANY),                # h0   (manual DMA)
                pl.BlockSpec(memory_space=pl.ANY),                # W_x  (manual DMA)
                pl.BlockSpec(memory_space=pl.ANY),                # W_h  (manual DMA)
                pl.BlockSpec(memory_space=pl.ANY),                # bias (manual DMA)
            ],
            out_specs=(
                pl.BlockSpec((Tc, Bp, Op), lambda c: (c, 0, 0)),  # per-chunk out
                pl.BlockSpec((Bp, Hp), lambda c: (0, 0)),         # final hidden
            ),
            scratch_shapes=[
                pltpu.VMEM((Ip, Hp + Op), bf16),                  # W_x resident
                pltpu.VMEM((Hp, Hp + Op), bf16),                  # W_h resident
                pltpu.VMEM((1, Hp + Op), f32),                    # bias resident
                pltpu.VMEM((Bp, Hp), f32),                        # hidden carry
                pltpu.SemaphoreType.DMA((4,)),
            ],
        ),
        compiler_params=pltpu.CompilerParams(
            # Time-chunk axis carries the hidden state -> must stay sequential.
            dimension_semantics=("arbitrary",),
            vmem_limit_bytes=vmem_limit,
        ),
    )(xs_p, h0_p, wx_p, wh_p, b_p)

    return out_p[:T, :B, :O], hT_p[:B, :H]


def rnn_forward(inp, hidden, wx_p, wh_p, b_p, *, output_size):
    """Single-step API matching RNN.forward(input, hidden) -> (output, hidden)."""
    out, new_hidden = rnn_sequence(inp[None], hidden, wx_p, wh_p, b_p,
                                   output_size=output_size, time_chunk=1)
    return out[0], new_hidden


def _init_linear(key, fan_in, fan_out):
    """nn.Linear-style init: U(-1/sqrt(fan_in), 1/sqrt(fan_in)).

    Weight is returned pre-transposed to (fan_in, fan_out); bias is (fan_out,)."""
    kw, kb = jax.random.split(key)
    bound = 1.0 / jnp.sqrt(fan_in)
    w = jax.random.uniform(kw, (fan_in, fan_out), jnp.float32, -bound, bound)
    b = jax.random.uniform(kb, (fan_out,), jnp.float32, -bound, bound)
    return w, b


if __name__ == "__main__":
    batch = 2
    input_size = 16
    hidden_size = 32
    output_size = 8
    seq_len = 8
    time_chunk = 3        # exercises chunking, cross-chunk carry, and tail masking

    key = jax.random.PRNGKey(0)
    k_x, k_h, k_i2h, k_i2o = jax.random.split(key, 4)

    xs = jax.random.normal(k_x, (seq_len, batch, input_size), jnp.float32)
    h0 = jax.random.normal(k_h, (batch, hidden_size), jnp.float32)

    w_i2h, b_i2h = _init_linear(k_i2h, input_size + hidden_size, hidden_size)
    w_i2o, b_i2o = _init_linear(k_i2o, input_size + hidden_size, output_size)

    # Weight fusion / padding hoisted to init time.
    wx_p, wh_p, b_p = prepare_params(w_i2h, b_i2h, w_i2o, b_i2o, input_size)

    seq_fn = jax.jit(rnn_sequence, static_argnames=("output_size", "time_chunk"))
    outs, hT = seq_fn(xs, h0, wx_p, wh_p, b_p,
                      output_size=output_size, time_chunk=time_chunk)
    jax.block_until_ready((outs, hT))

    # Plain-JAX reference mirroring the module semantics with bf16 matmul inputs
    # and f32 accumulation (same numerics as the kernel).
    bf16 = jnp.bfloat16

    def ref_step(x, h):
        comb = jnp.concatenate([x, h], axis=1).astype(bf16)
        new_h = jnp.dot(comb, w_i2h.astype(bf16),
                        preferred_element_type=jnp.float32) + b_i2h
        logits = jnp.dot(comb, w_i2o.astype(bf16),
                         preferred_element_type=jnp.float32) + b_i2o
        return jax.nn.log_softmax(logits, axis=1), new_h

    ref_outs = []
    h_ref = h0
    for t in range(seq_len):
        o_t, h_ref = ref_step(xs[t], h_ref)
        ref_outs.append(o_t)
    ref_outs = jnp.stack(ref_outs, axis=0)

    assert outs.shape == (seq_len, batch, output_size)
    assert hT.shape == (batch, hidden_size)
    assert jnp.allclose(outs, ref_outs, atol=1e-2, rtol=1e-2), "sequence output mismatch"
    assert jnp.allclose(hT, h_ref, atol=1e-2, rtol=1e-2), "final hidden mismatch"

    # Single-step call (exact analogue of the module's forward).
    out1, h1 = rnn_forward(xs[0], h0, wx_p, wh_p, b_p, output_size=output_size)
    jax.block_until_ready((out1, h1))
    ref_out1, ref_h1 = ref_step(xs[0], h0)
    assert jnp.allclose(out1, ref_out1, atol=1e-2, rtol=1e-2), "step output mismatch"
    assert jnp.allclose(h1, ref_h1, atol=1e-2, rtol=1e-2), "step hidden mismatch"

    print("KERNEL_OK")
</pallas_src>

<mosaic_0001>
module attributes {stable_mosaic.version = 11 : i64} {
  func.func @kernel(%arg0: i32, %arg1: memref<3x8x128xbf16, #tpu.memory_space<vmem>>, %arg2: memref<8x128xf32, #tpu.memory_space<any>>, %arg3: memref<128x256xbf16, #tpu.memory_space<any>>, %arg4: memref<128x256xbf16, #tpu.memory_space<any>>, %arg5: memref<1x256xf32, #tpu.memory_space<any>>, %arg6: memref<3x8x128xf32, #tpu.memory_space<vmem>>, %arg7: memref<8x128xf32, #tpu.memory_space<vmem>>, %arg8: memref<128x256xbf16, #tpu.memory_space<vmem>>, %arg9: memref<128x256xbf16, #tpu.memory_space<vmem>>, %arg10: memref<1x256xf32, #tpu.memory_space<vmem>>, %arg11: memref<8x128xf32, #tpu.memory_space<vmem>>, %arg12: memref<4x!tpu.dma_semaphore, #tpu.memory_space<semaphore_mem>>) attributes {dimension_semantics = [#tpu.dimension_semantics<arbitrary>], iteration_bounds = array<i64: 3>, scalar_prefetch = 0 : i64, scratch_operands = 5 : i64, tpu.core_type = #tpu.core_type<tc>, window_params = [{transform_indices = @transform_0, window_bounds = array<i64: 3, 8, 128>}, {}, {}, {}, {}, {transform_indices = @transform_5, window_bounds = array<i64: 3, 8, 128>}, {pipeline_mode = #tpu.pipeline_mode<synchronous>, transform_indices = @transform_6, window_bounds = array<i64: 8, 128>}]} {
    %c0_i32 = arith.constant 0 : i32
    %0 = arith.cmpi eq, %arg0, %c0_i32 : i32
    %1 = arith.extui %0 : i1 to i32
    %c0_i32_0 = arith.constant 0 : i32
    %2 = arith.cmpi ne, %1, %c0_i32_0 : i32
    scf.if %2 {
      %c0_i32_51 = arith.constant 0 : i32
      %102 = tpu.memref_slice %arg12[%c0_i32_51] : memref<4x!tpu.dma_semaphore, #tpu.memory_space<semaphore_mem>> -> memref<1x!tpu.dma_semaphore, #tpu.memory_space<semaphore_mem>>
      %103 = tpu.memref_squeeze %102 : memref<1x!tpu.dma_semaphore, #tpu.memory_space<semaphore_mem>> -> memref<!tpu.dma_semaphore, #tpu.memory_space<semaphore_mem>>
      tpu.enqueue_dma source(%arg3 : memref<128x256xbf16, #tpu.memory_space<any>>) target(%arg8 : memref<128x256xbf16, #tpu.memory_space<vmem>>) target_semaphore(%103 : memref<!tpu.dma_semaphore, #tpu.memory_space<semaphore_mem>>)
      %c1_i32_52 = arith.constant 1 : i32
      %104 = tpu.memref_slice %arg12[%c1_i32_52] : memref<4x!tpu.dma_semaphore, #tpu.memory_space<semaphore_mem>> -> memref<1x!tpu.dma_semaphore, #tpu.memory_space<semaphore_mem>>
      %105 = tpu.memref_squeeze %104 : memref<1x!tpu.dma_semaphore, #tpu.memory_space<semaphore_mem>> -> memref<!tpu.dma_semaphore, #tpu.memory_space<semaphore_mem>>
      tpu.enqueue_dma source(%arg4 : memref<128x256xbf16, #tpu.memory_space<any>>) target(%arg9 : memref<128x256xbf16, #tpu.memory_space<vmem>>) target_semaphore(%105 : memref<!tpu.dma_semaphore, #tpu.memory_space<semaphore_mem>>)
      %c2_i32_53 = arith.constant 2 : i32
      %106 = tpu.memref_slice %arg12[%c2_i32_53] : memref<4x!tpu.dma_semaphore, #tpu.memory_space<semaphore_mem>> -> memref<1x!tpu.dma_semaphore, #tpu.memory_space<semaphore_mem>>
      %107 = tpu.memref_squeeze %106 : memref<1x!tpu.dma_semaphore, #tpu.memory_space<semaphore_mem>> -> memref<!tpu.dma_semaphore, #tpu.memory_space<semaphore_mem>>
      tpu.enqueue_dma source(%arg5 : memref<1x256xf32, #tpu.memory_space<any>>) target(%arg10 : memref<1x256xf32, #tpu.memory_space<vmem>>) target_semaphore(%107 : memref<!tpu.dma_semaphore, #tpu.memory_space<semaphore_mem>>)
      %c3_i32_54 = arith.constant 3 : i32
      %108 = tpu.memref_slice %arg12[%c3_i32_54] : memref<4x!tpu.dma_semaphore, #tpu.memory_space<semaphore_mem>> -> memref<1x!tpu.dma_semaphore, #tpu.memory_space<semaphore_mem>>
      %109 = tpu.memref_squeeze %108 : memref<1x!tpu.dma_semaphore, #tpu.memory_space<semaphore_mem>> -> memref<!tpu.dma_semaphore, #tpu.memory_space<semaphore_mem>>
      tpu.enqueue_dma source(%arg2 : memref<8x128xf32, #tpu.memory_space<any>>) target(%arg11 : memref<8x128xf32, #tpu.memory_space<vmem>>) target_semaphore(%109 : memref<!tpu.dma_semaphore, #tpu.memory_space<semaphore_mem>>)
      %c0_i32_55 = arith.constant 0 : i32
      %110 = tpu.memref_slice %arg12[%c0_i32_55] : memref<4x!tpu.dma_semaphore, #tpu.memory_space<semaphore_mem>> -> memref<1x!tpu.dma_semaphore, #tpu.memory_space<semaphore_mem>>
      %111 = tpu.memref_squeeze %110 : memref<1x!tpu.dma_semaphore, #tpu.memory_space<semaphore_mem>> -> memref<!tpu.dma_semaphore, #tpu.memory_space<semaphore_mem>>
      tpu.wait_dma2 semaphore(%111 : memref<!tpu.dma_semaphore, #tpu.memory_space<semaphore_mem>>) src(%arg3 : memref<128x256xbf16, #tpu.memory_space<any>>) dst(%arg8 : memref<128x256xbf16, #tpu.memory_space<vmem>>)
      %c1_i32_56 = arith.constant 1 : i32
      %112 = tpu.memref_slice %arg12[%c1_i32_56] : memref<4x!tpu.dma_semaphore, #tpu.memory_space<semaphore_mem>> -> memref<1x!tpu.dma_semaphore, #tpu.memory_space<semaphore_mem>>
      %113 = tpu.memref_squeeze %112 : memref<1x!tpu.dma_semaphore, #tpu.memory_space<semaphore_mem>> -> memref<!tpu.dma_semaphore, #tpu.memory_space<semaphore_mem>>
      tpu.wait_dma2 semaphore(%113 : memref<!tpu.dma_semaphore, #tpu.memory_space<semaphore_mem>>) src(%arg4 : memref<128x256xbf16, #tpu.memory_space<any>>) dst(%arg9 : memref<128x256xbf16, #tpu.memory_space<vmem>>)
      %c2_i32_57 = arith.constant 2 : i32
      %114 = tpu.memref_slice %arg12[%c2_i32_57] : memref<4x!tpu.dma_semaphore, #tpu.memory_space<semaphore_mem>> -> memref<1x!tpu.dma_semaphore, #tpu.memory_space<semaphore_mem>>
      %115 = tpu.memref_squeeze %114 : memref<1x!tpu.dma_semaphore, #tpu.memory_space<semaphore_mem>> -> memref<!tpu.dma_semaphore, #tpu.memory_space<semaphore_mem>>
      tpu.wait_dma2 semaphore(%115 : memref<!tpu.dma_semaphore, #tpu.memory_space<semaphore_mem>>) src(%arg5 : memref<1x256xf32, #tpu.memory_space<any>>) dst(%arg10 : memref<1x256xf32, #tpu.memory_space<vmem>>)
      %c3_i32_58 = arith.constant 3 : i32
      %116 = tpu.memref_slice %arg12[%c3_i32_58] : memref<4x!tpu.dma_semaphore, #tpu.memory_space<semaphore_mem>> -> memref<1x!tpu.dma_semaphore, #tpu.memory_space<semaphore_mem>>
      %117 = tpu.memref_squeeze %116 : memref<1x!tpu.dma_semaphore, #tpu.memory_space<semaphore_mem>> -> memref<!tpu.dma_semaphore, #tpu.memory_space<semaphore_mem>>
      tpu.wait_dma2 semaphore(%117 : memref<!tpu.dma_semaphore, #tpu.memory_space<semaphore_mem>>) src(%arg2 : memref<8x128xf32, #tpu.memory_space<any>>) dst(%arg11 : memref<8x128xf32, #tpu.memory_space<vmem>>)
    } else {
    }
    %c3_i32 = arith.constant 3 : i32
    %3 = arith.muli %arg0, %c3_i32 : i32
    %c0 = arith.constant 0 : index
    %c0_1 = arith.constant 0 : index
    %4 = vector.load %arg11[%c0, %c0_1] : memref<8x128xf32, #tpu.memory_space<vmem>>, vector<8x128xf32>
    %c0_i32_2 = arith.constant 0 : i32
    %5 = arith.index_cast %c0_i32_2 : i32 to index
    %c0_3 = arith.constant 0 : index
    %c0_4 = arith.constant 0 : index
    %6 = vector.load %arg1[%5, %c0_3, %c0_4] : memref<3x8x128xbf16, #tpu.memory_space<vmem>>, vector<1x8x128xbf16>
    %7 = vector.shape_cast %6 : vector<1x8x128xbf16> to vector<8x128xbf16>
    %c0_5 = arith.constant 0 : index
    %c0_6 = arith.constant 0 : index
    %8 = vector.load %arg8[%c0_5, %c0_6] : memref<128x256xbf16, #tpu.memory_space<vmem>>, vector<128x256xbf16>
    %cst = arith.constant dense<0.000000e+00> : vector<8x256xf32>
    %9 = tpu.matmul %7, %8, %cst {dimension_numbers = #tpu.dot_dimension_numbers<[1], [0], [0], [1], [0, 0, 1, 1], [], []>} : vector<8x128xbf16>, vector<128x256xbf16>, vector<8x256xf32> -> vector<8x256xf32>
    %10 = arith.truncf %4 : vector<8x128xf32> to vector<8x128xbf16>
    %c0_7 = arith.constant 0 : index
    %c0_8 = arith.constant 0 : index
    %11 = vector.load %arg9[%c0_7, %c0_8] : memref<128x256xbf16, #tpu.memory_space<vmem>>, vector<128x256xbf16>
    %cst_9 = arith.constant dense<0.000000e+00> : vector<8x256xf32>
    %12 = tpu.matmul %10, %11, %cst_9 {dimension_numbers = #tpu.dot_dimension_numbers<[1], [0], [0], [1], [0, 0, 1, 1], [], []>} : vector<8x128xbf16>, vector<128x256xbf16>, vector<8x256xf32> -> vector<8x256xf32>
    %13 = arith.addf %9, %12 : vector<8x256xf32>
    %c0_10 = arith.constant 0 : index
    %c0_11 = arith.constant 0 : index
    %14 = vector.load %arg10[%c0_10, %c0_11] : memref<1x256xf32, #tpu.memory_space<vmem>>, vector<1x256xf32>
    %15 = vector.broadcast %14 : vector<1x256xf32> to vector<8x256xf32>
    %16 = arith.addf %13, %15 : vector<8x256xf32>
    %17 = vector.extract_strided_slice %16 {offsets = [0, 0], sizes = [8, 128], strides = [1, 1]} : vector<8x256xf32> to vector<8x128xf32>
    %18 = vector.extract_strided_slice %16 {offsets = [0, 128], sizes = [8, 128], strides = [1, 1]} : vector<8x256xf32> to vector<8x128xf32>
    %cst_12 = arith.constant dense<0xFF800000> : vector<8xf32>
    %19 = vector.multi_reduction <maximumf>, %18, %cst_12 [1] : vector<8x128xf32> to vector<8xf32>
    %20 = vector.shape_cast %19 : vector<8xf32> to vector<8x1xf32>
    %21 = vector.broadcast %20 : vector<8x1xf32> to vector<8x128xf32>
    %22 = arith.subf %18, %21 : vector<8x128xf32>
    %23 = math.exp %22 : vector<8x128xf32>
    %cst_13 = arith.constant dense<0.000000e+00> : vector<8xf32>
    %24 = vector.multi_reduction <add>, %23, %cst_13 [1] : vector<8x128xf32> to vector<8xf32>
    %25 = vector.shape_cast %24 : vector<8xf32> to vector<8x1xf32>
    %26 = math.log %25 : vector<8x1xf32>
    %27 = vector.broadcast %26 : vector<8x1xf32> to vector<8x128xf32>
    %28 = arith.subf %22, %27 : vector<8x128xf32>
    %29 = arith.index_cast %c0_i32_2 : i32 to index
    %c0_14 = arith.constant 0 : index
    %c0_15 = arith.constant 0 : index
    %30 = vector.load %arg6[%29, %c0_14, %c0_15] : memref<3x8x128xf32, #tpu.memory_space<vmem>>, vector<1x8x128xf32>
    %31 = vector.shape_cast %30 : vector<1x8x128xf32> to vector<8x128xf32>
    %32 = vector.shape_cast %28 : vector<8x128xf32> to vector<1x8x128xf32>
    tpu.vector_store %arg6[%29, %c0_14, %c0_15], %32 {strides = array<i32>} : memref<3x8x128xf32, #tpu.memory_space<vmem>>, vector<1x8x128xf32>,
    %33 = arith.addi %3, %c0_i32_2 : i32
    %c8_i32 = arith.constant 8 : i32
    %34 = arith.cmpi slt, %33, %c8_i32 : i32
    %35 = arith.select %34, %17, %4 : vector<8x128xf32>
    %c1_i32 = arith.constant 1 : i32
    %36 = arith.index_cast %c1_i32 : i32 to index
    %c0_16 = arith.constant 0 : index
    %c0_17 = arith.constant 0 : index
    %37 = vector.load %arg1[%36, %c0_16, %c0_17] : memref<3x8x128xbf16, #tpu.memory_space<vmem>>, vector<1x8x128xbf16>
    %38 = vector.shape_cast %37 : vector<1x8x128xbf16> to vector<8x128xbf16>
    %c0_18 = arith.constant 0 : index
    %c0_19 = arith.constant 0 : index
    %39 = vector.load %arg8[%c0_18, %c0_19] : memref<128x256xbf16, #tpu.memory_space<vmem>>, vector<128x256xbf16>
    %cst_20 = arith.constant dense<0.000000e+00> : vector<8x256xf32>
    %40 = tpu.matmul %38, %39, %cst_20 {dimension_numbers = #tpu.dot_dimension_numbers<[1], [0], [0], [1], [0, 0, 1, 1], [], []>} : vector<8x128xbf16>, vector<128x256xbf16>, vector<8x256xf32> -> vector<8x256xf32>
    %41 = arith.truncf %35 : vector<8x128xf32> to vector<8x128xbf16>
    %c0_21 = arith.constant 0 : index
    %c0_22 = arith.constant 0 : index
    %42 = vector.load %arg9[%c0_21, %c0_22] : memref<128x256xbf16, #tpu.memory_space<vmem>>, vector<128x256xbf16>
    %cst_23 = arith.constant dense<0.000000e+00> : vector<8x256xf32>
    %43 = tpu.matmul %41, %42, %cst_23 {dimension_numbers = #tpu.dot_dimension_numbers<[1], [0], [0], [1], [0, 0, 1, 1], [], []>} : vector<8x128xbf16>, vector<128x256xbf16>, vector<8x256xf32> -> vector<8x256xf32>
    %44 = arith.addf %40, %43 : vector<8x256xf32>
    %c0_24 = arith.constant 0 : index
    %c0_25 = arith.constant 0 : index
    %45 = vector.load %arg10[%c0_24, %c0_25] : memref<1x256xf32, #tpu.memory_space<vmem>>, vector<1x256xf32>
    %46 = vector.broadcast %45 : vector<1x256xf32> to vector<8x256xf32>
    %47 = arith.addf %44, %46 : vector<8x256xf32>
    %48 = vector.extract_strided_slice %47 {offsets = [0, 0], sizes = [8, 128], strides = [1, 1]} : vector<8x256xf32> to vector<8x128xf32>
    %49 = vector.extract_strided_slice %47 {offsets = [0, 128], sizes = [8, 128], strides = [1, 1]} : vector<8x256xf32> to vector<8x128xf32>
    %cst_26 = arith.constant dense<0xFF800000> : vector<8xf32>
    %50 = vector.multi_reduction <maximumf>, %49, %cst_26 [1] : vector<8x128xf32> to vector<8xf32>
    %51 = vector.shape_cast %50 : vector<8xf32> to vector<8x1xf32>
    %52 = vector.broadcast %51 : vector<8x1xf32> to vector<8x128xf32>
    %53 = arith.subf %49, %52 : vector<8x128xf32>
    %54 = math.exp %53 : vector<8x128xf32>
    %cst_27 = arith.constant dense<0.000000e+00> : vector<8xf32>
    %55 = vector.multi_reduction <add>, %54, %cst_27 [1] : vector<8x128xf32> to vector<8xf32>
    %56 = vector.shape_cast %55 : vector<8xf32> to vector<8x1xf32>
    %57 = math.log %56 : vector<8x1xf32>
    %58 = vector.broadcast %57 : vector<8x1xf32> to vector<8x128xf32>
    %59 = arith.subf %53, %58 : vector<8x128xf32>
    %60 = arith.index_cast %c1_i32 : i32 to index
    %c0_28 = arith.constant 0 : index
    %c0_29 = arith.constant 0 : index
    %61 = vector.load %arg6[%60, %c0_28, %c0_29] : memref<3x8x128xf32, #tpu.memory_space<vmem>>, vector<1x8x128xf32>
    %62 = vector.shape_cast %61 : vector<1x8x128xf32> to vector<8x128xf32>
    %63 = vector.shape_cast %59 : vector<8x128xf32> to vector<1x8x128xf32>
    tpu.vector_store %arg6[%60, %c0_28, %c0_29], %63 {strides = array<i32>} : memref<3x8x128xf32, #tpu.memory_space<vmem>>, vector<1x8x128xf32>,
    %64 = arith.addi %3, %c1_i32 : i32
    %c8_i32_30 = arith.constant 8 : i32
    %65 = arith.cmpi slt, %64, %c8_i32_30 : i32
    %66 = arith.select %65, %48, %35 : vector<8x128xf32>
    %c2_i32 = arith.constant 2 : i32
    %67 = arith.index_cast %c2_i32 : i32 to index
    %c0_31 = arith.constant 0 : index
    %c0_32 = arith.constant 0 : index
    %68 = vector.load %arg1[%67, %c0_31, %c0_32] : memref<3x8x128xbf16, #tpu.memory_space<vmem>>, vector<1x8x128xbf16>
    %69 = vector.shape_cast %68 : vector<1x8x128xbf16> to vector<8x128xbf16>
    %c0_33 = arith.constant 0 : index
    %c0_34 = arith.constant 0 : index
    %70 = vector.load %arg8[%c0_33, %c0_34] : memref<128x256xbf16, #tpu.memory_space<vmem>>, vector<128x256xbf16>
    %cst_35 = arith.constant dense<0.000000e+00> : vector<8x256xf32>
    %71 = tpu.matmul %69, %70, %cst_35 {dimension_numbers = #tpu.dot_dimension_numbers<[1], [0], [0], [1], [0, 0, 1, 1], [], []>} : vector<8x128xbf16>, vector<128x256xbf16>, vector<8x256xf32> -> vector<8x256xf32>
    %72 = arith.truncf %66 : vector<8x128xf32> to vector<8x128xbf16>
    %c0_36 = arith.constant 0 : index
    %c0_37 = arith.constant 0 : index
    %73 = vector.load %arg9[%c0_36, %c0_37] : memref<128x256xbf16, #tpu.memory_space<vmem>>, vector<128x256xbf16>
    %cst_38 = arith.constant dense<0.000000e+00> : vector<8x256xf32>
    %74 = tpu.matmul %72, %73, %cst_38 {dimension_numbers = #tpu.dot_dimension_numbers<[1], [0], [0], [1], [0, 0, 1, 1], [], []>} : vector<8x128xbf16>, vector<128x256xbf16>, vector<8x256xf32> -> vector<8x256xf32>
    %75 = arith.addf %71, %74 : vector<8x256xf32>
    %c0_39 = arith.constant 0 : index
    %c0_40 = arith.constant 0 : index
    %76 = vector.load %arg10[%c0_39, %c0_40] : memref<1x256xf32, #tpu.memory_space<vmem>>, vector<1x256xf32>
    %77 = vector.broadcast %76 : vector<1x256xf32> to vector<8x256xf32>
    %78 = arith.addf %75, %77 : vector<8x256xf32>
    %79 = vector.extract_strided_slice %78 {offsets = [0, 0], sizes = [8, 128], strides = [1, 1]} : vector<8x256xf32> to vector<8x128xf32>
    %80 = vector.extract_strided_slice %78 {offsets = [0, 128], sizes = [8, 128], strides = [1, 1]} : vector<8x256xf32> to vector<8x128xf32>
    %cst_41 = arith.constant dense<0xFF800000> : vector<8xf32>
    %81 = vector.multi_reduction <maximumf>, %80, %cst_41 [1] : vector<8x128xf32> to vector<8xf32>
    %82 = vector.shape_cast %81 : vector<8xf32> to vector<8x1xf32>
    %83 = vector.broadcast %82 : vector<8x1xf32> to vector<8x128xf32>
    %84 = arith.subf %80, %83 : vector<8x128xf32>
    %85 = math.exp %84 : vector<8x128xf32>
    %cst_42 = arith.constant dense<0.000000e+00> : vector<8xf32>
    %86 = vector.multi_reduction <add>, %85, %cst_42 [1] : vector<8x128xf32> to vector<8xf32>
    %87 = vector.shape_cast %86 : vector<8xf32> to vector<8x1xf32>
    %88 = math.log %87 : vector<8x1xf32>
    %89 = vector.broadcast %88 : vector<8x1xf32> to vector<8x128xf32>
    %90 = arith.subf %84, %89 : vector<8x128xf32>
    %91 = arith.index_cast %c2_i32 : i32 to index
    %c0_43 = arith.constant 0 : index
    %c0_44 = arith.constant 0 : index
    %92 = vector.load %arg6[%91, %c0_43, %c0_44] : memref<3x8x128xf32, #tpu.memory_space<vmem>>, vector<1x8x128xf32>
    %93 = vector.shape_cast %92 : vector<1x8x128xf32> to vector<8x128xf32>
    %94 = vector.shape_cast %90 : vector<8x128xf32> to vector<1x8x128xf32>
    tpu.vector_store %arg6[%91, %c0_43, %c0_44], %94 {strides = array<i32>} : memref<3x8x128xf32, #tpu.memory_space<vmem>>, vector<1x8x128xf32>,
    %95 = arith.addi %3, %c2_i32 : i32
    %c8_i32_45 = arith.constant 8 : i32
    %96 = arith.cmpi slt, %95, %c8_i32_45 : i32
    %97 = arith.select %96, %79, %66 : vector<8x128xf32>
    %c3_i32_46 = arith.constant 3 : i32
    %c0_47 = arith.constant 0 : index
    %c0_48 = arith.constant 0 : index
    %98 = vector.load %arg11[%c0_47, %c0_48] : memref<8x128xf32, #tpu.memory_space<vmem>>, vector<8x128xf32>
    tpu.vector_store %arg11[%c0_47, %c0_48], %97 {strides = array<i32>} : memref<8x128xf32, #tpu.memory_space<vmem>>, vector<8x128xf32>,
    %c2_i32_49 = arith.constant 2 : i32
    %99 = arith.cmpi eq, %arg0, %c2_i32_49 : i32
    %100 = arith.extui %99 : i1 to i32
    %c0_i32_50 = arith.constant 0 : i32
    %101 = arith.cmpi ne, %100, %c0_i32_50 : i32
    scf.if %101 {
      %c0_51 = arith.constant 0 : index
      %c0_52 = arith.constant 0 : index
      %102 = vector.load %arg7[%c0_51, %c0_52] : memref<8x128xf32, #tpu.memory_space<vmem>>, vector<8x128xf32>
      tpu.vector_store %arg7[%c0_51, %c0_52], %97 {strides = array<i32>} : memref<8x128xf32, #tpu.memory_space<vmem>>, vector<8x128xf32>,
    } else {
    }
    return
  }
  func.func @transform_0(%arg0: i32) -> (i32, i32, i32) {
    %c0_i32 = arith.constant 0 : i32
    %c0_i32_0 = arith.constant 0 : i32
    %c0_i32_1 = arith.constant 0 : i32
    return %arg0, %c0_i32, %c0_i32_0 : i32, i32, i32
  }
  func.func @transform_5(%arg0: i32) -> (i32, i32, i32) {
    %c0_i32 = arith.constant 0 : i32
    %c0_i32_0 = arith.constant 0 : i32
    %c0_i32_1 = arith.constant 0 : i32
    return %arg0, %c0_i32, %c0_i32_0 : i32, i32, i32
  }
  func.func @transform_6(%arg0: i32) -> (i32, i32) {
    %c0_i32 = arith.constant 0 : i32
    %c0_i32_0 = arith.constant 0 : i32
    %c0_i32_1 = arith.constant 0 : i32
    return %c0_i32, %c0_i32_0 : i32, i32
  }
}

</mosaic_0001>

<llo_original>
// kernel: rnn_sequence.1
$region0: #{rnn_sequence.1}
  #allocation0 [shape = 'u32[]', space=smem, size = 0x4, offset = 0x4, fixed_abs, tag = 'smem constant byte address 0x4 - core index']
  #allocation1 [shape = 'u32[144,128]{1,0:T(1,128)}', space=vmem, size = 0x12000, scoped, tag = 'internal scratch']
  #allocation2 [shape = 'bf16[128,256]{1,0:T(8,128)(2,1)}', space=vmem, size = 0x10000, scoped, tag = 'scratch operand']
  #allocation3 [shape = 'bf16[128,256]{1,0:T(8,128)(2,1)}', space=vmem, size = 0x10000, scoped, tag = 'scratch operand']
  #allocation4 [shape = 'f32[1,256]{1,0:T(1,128)}', space=vmem, size = 0x400, scoped, tag = 'scratch operand']
  #allocation5 [shape = 'f32[8,128]{1,0:T(8,128)}', space=vmem, size = 0x1000, scoped, tag = 'scratch operand']
  #allocation6 [shape = 's32[4]{0}', space=sflag, size = 0x10, scoped, tag = 'scratch operand']
  #allocation7 [shape = 's32[]', space=sflag, size = 0x4, offset = 0, fixed_abs, tag = 'sflag constant byte address 0x0 - dummy sync flag']
  #allocation8 [shape = 's32[]', space=sflag, size = 0x4, offset = 0, fixed_abs, tag = 'sflag constant byte address 0x0 - dummy sync flag']
  #allocation9 [shape = 'u32[]', space=smem, size = 0x4, offset = 0x44, fixed_abs, tag = 'smem constant byte address 0x44 - assertion arg 0']
  #allocation10 [shape = 'u32[]', space=smem, size = 0x4, offset = 0x48, fixed_abs, tag = 'smem constant byte address 0x48 - assertion arg 1']
  #allocation11 [shape = 's32[]', space=sflag, size = 0x4, offset = 0, fixed_abs, tag = 'sflag constant byte address 0x0 - dummy sync flag']
  #allocation12 [shape = 's32[]', space=sflag, size = 0x4, offset = 0, fixed_abs, tag = 'sflag constant byte address 0x0 - dummy sync flag']
  #allocation13 [shape = 's32[]', space=sflag, size = 0x4, offset = 0, fixed_abs, tag = 'sflag constant byte address 0x0 - dummy sync flag']
  #allocation14 [shape = 's32[]', space=sflag, size = 0x4, offset = 0, fixed_abs, tag = 'sflag constant byte address 0x0 - dummy sync flag']
  %s0 = inlined_call_operand.vmem [shape: bf16[9,8,128], index: 0, kind: input, shape index: {}]
  %s1 = inlined_call_operand.vmem [shape: f32[8,128], index: 1, kind: input, shape index: {}]
  %s2 = inlined_call_operand.hbm [shape: bf16[128,256], index: 2, kind: input, shape index: {}]
  %s3 = inlined_call_operand.hbm [shape: bf16[128,256], index: 3, kind: input, shape index: {}]
  %s4 = inlined_call_operand.vmem [shape: f32[1,256], index: 4, kind: input, shape index: {}]
  %s5 = inlined_call_operand.vmem [shape: f32[9,8,128], index: 5, kind: output, shape index: {0}]
  %s6 = inlined_call_operand.vmem [shape: f32[8,128], index: 6, kind: output, shape index: {1}]
  %7 = xla_tuple %s5, %s6
  %s8 = sld [smem:[#allocation0]]
  $region125: #{rnn_sequence.1} parent=0
    _
  %s10 = ssub.s32 1, %s8
  %s11 = scalar_select 0, %s10, %s8
  loop: start=0, step=1, limit=5
  $region2: #{rnn_sequence.1} parent=0 // loop_pre_header
    _
  $region3: #{rnn_sequence.1} parent=0 // loop_header
    %s13 = sphi 0, %s17
    %p14 = scmp.ge.s32.totalorder %s13, 5
    %s23 = sphi 0, %s25
    %s26 = sphi 0, %s23
    %s27 = sphi 0, %s26
    %s43 = sphi 0, %s27
    %s49 = sphi 0, %s51
    %s52 = sphi 0, %s49
    %s53 = sphi 0, %s52
    %s69 = sphi 0, %s53
    %s73 = sphi 0, %s73
    %s75 = sphi 0, %s73
    %s76 = sphi 0, %s75
    %s90 = sphi 0, %s76
  $region4: #{rnn_sequence.1} parent=0 // loop_header_branch
    %16 = sbr.rel (%p14) target = $region8
  $region5: #{rnn_sequence.1} parent=0 // loop_body
    %s18 = ssub.s32 %s13, 1
    %s19 = ssub.s32 %s13, 2
    %s20 = sadd.s32 %s13, 1
    %s21 = ssub.s32 %s13, %s20
    %p22 = scmp.eq.s32.totalorder %s21, 0
    %s24 = sadd.s32 %s23, 1
    %s25 = scalar_select %p22, %s23, %s24
    %p28 = pneg %p22
    %p29 = scmp.eq.s32.totalorder %s13, 2
    %p30 = por %p28, %p29
    %p31 = scmp.ne.s32.totalorder %s23, %s26
    %p32 = scmp.eq.s32.totalorder %s13, 0
    %p33 = por %p31, %p32
    %p34 = scmp.ne.s32.totalorder %s23, %s26
    %p35 = scmp.eq.s32.totalorder %s18, 2
    %p36 = por %p34, %p35
    %p37 = scmp.ne.s32.totalorder %s26, %s27
    %p38 = scmp.eq.s32.totalorder %s18, 0
    %p39 = por %p37, %p38
    %p40 = scmp.ne.s32.totalorder %s26, %s27
    %p41 = scmp.eq.s32.totalorder %s19, 2
    %p42 = por %p40, %p41
    %p44 = scmp.ne.s32.totalorder %s27, %s43
    %p45 = scmp.eq.s32.totalorder %s19, 0
    %p46 = por %p44, %p45
    %s47 = ssub.s32 %s13, %s20
    %p48 = scmp.eq.s32.totalorder %s47, 0
    %s50 = sadd.s32 %s49, 1
    %s51 = scalar_select %p48, %s49, %s50
    %p54 = pneg %p48
    %p55 = scmp.eq.s32.totalorder %s13, 2
    %p56 = por %p54, %p55
    %p57 = scmp.ne.s32.totalorder %s49, %s52
    %p58 = scmp.eq.s32.totalorder %s13, 0
    %p59 = por %p57, %p58
    %p60 = scmp.ne.s32.totalorder %s49, %s52
    %p61 = scmp.eq.s32.totalorder %s18, 2
    %p62 = por %p60, %p61
    %p63 = scmp.ne.s32.totalorder %s52, %s53
    %p64 = scmp.eq.s32.totalorder %s18, 0
    %p65 = por %p63, %p64
    %p66 = scmp.ne.s32.totalorder %s52, %s53
    %p67 = scmp.eq.s32.totalorder %s19, 2
    %p68 = por %p66, %p67
    %p70 = scmp.ne.s32.totalorder %s53, %s69
    %p71 = scmp.eq.s32.totalorder %s19, 0
    %p72 = por %p70, %p71
    %s74 = sadd.s32 %s73, 1
    %p77 = scmp.eq.s32.totalorder %s13, 2
    %p78 = scmp.ne.s32.totalorder %s73, %s75
    %p79 = scmp.eq.s32.totalorder %s13, 0
    %p80 = por %p78, %p79
    %p81 = scmp.ne.s32.totalorder %s73, %s75
    %p82 = scmp.eq.s32.totalorder %s18, 2
    %p83 = por %p81, %p82
    %p84 = scmp.ne.s32.totalorder %s75, %s76
    %p85 = scmp.eq.s32.totalorder %s18, 0
    %p86 = por %p84, %p85
    %p87 = scmp.ne.s32.totalorder %s75, %s76
    %p88 = scmp.eq.s32.totalorder %s19, 2
    %p89 = por %p87, %p88
    %p91 = scmp.ne.s32.totalorder %s76, %s90
    %p92 = scmp.eq.s32.totalorder %s19, 0
    %p93 = por %p91, %p92
    %p94 = scmp.le.s32.totalorder 1, %s13
    %p95 = scmp.lt.s32.totalorder %s13, 4
    %p96 = pnand %p94, %p95
    %p97 = pneg %p96
    // Predicated region
    $region9: #{rnn_sequence.1} parent=5 // pred_check
      _
    $region10: #{rnn_sequence.1} parent=5 // pred_check_branch
      %99 = sbr.rel (%p96) target = $region12
    $region11: #{rnn_sequence.1} parent=5 // pred_region
      %s100 = ssub.s32 %s13, 1
    $region12: #{rnn_sequence.1} parent=5 // pred_fallthru
      _
    %p101 = scmp.lt.s32.totalorder %s13, 3
    // Predicated region
    $region13: #{rnn_sequence.1} parent=5 // pred_check
      %p102 = pneg %p101
    $region14: #{rnn_sequence.1} parent=5 // pred_check_branch
      %104 = sbr.rel (%p102) target = $region16
    $region15: #{rnn_sequence.1} parent=5 // pred_region
      // Predicated region
      $region17: #{rnn_sequence.1} parent=15 // pred_check
        %p105 = pneg %p33
      $region18: #{rnn_sequence.1} parent=15 // pred_check_branch
        %107 = sbr.rel (%p105) target = $region20
      $region19: #{rnn_sequence.1} parent=15 // pred_region
        %s108 = smul.u32 3, %s13
        %p109 = scmp.lt.s32.totalorder %s108, 8
        %s110 = scalar_select %p109, %s108, 8
        %s111 = smul.addr %s110, 4
        %s112 = scalar_lea.vmem %s0, %s111
        %s113 = smul.u32 3, %s13
      $region20: #{rnn_sequence.1} parent=15 // pred_fallthru
        _
    $region16: #{rnn_sequence.1} parent=5 // pred_fallthru
      _
    %p114 = scmp.le.s32.totalorder 1, %s13
    %p115 = scmp.lt.s32.totalorder %s13, 4
    %p116 = pnand %p114, %p115
    %p117 = pneg %p116
    // Predicated region
    $region21: #{rnn_sequence.1} parent=5 // pred_check
      _
    $region22: #{rnn_sequence.1} parent=5 // pred_check_branch
      %119 = sbr.rel (%p116) target = $region24
    $region23: #{rnn_sequence.1} parent=5 // pred_region
      %s120 = ssub.s32 %s13, 1
      %s121 = smul.u32 3, %s18
      %p122 = scmp.lt.s32.totalorder %s121, 8
      %s123 = scalar_select %p122, %s121, 8
      %s124 = smul.addr %s123, 4
      %s125 = scalar_lea.vmem %s0, %s124
      %p126 = pneg %p39
      %p127 = pneg %p36
      %p128 = pneg %p65
      %p129 = pneg %p62
      %s130 = smul.u32 3, %s18
      %p131 = scmp.lt.s32.totalorder %s130, 8
      %s132 = scalar_select %p131, %s130, 8
      %s133 = smul.addr %s132, 8
      %s134 = scalar_lea.vmem %s5, %s133
      %p135 = pneg %p86
      %p136 = pneg %p83
      %s137 = smul.u32 3, %s18
      %p138 = scmp.lt.s32.totalorder %s137, 8
      %s139 = scalar_select %p138, %s137, 8
      %s140 = smul.addr %s139, 4
      %s141 = scalar_lea.vmem %s0, %s140
      %s142 = smul.u32 3, %s18
      %s143 = smul.u32 3, %s18
      %p144 = scmp.lt.s32.totalorder %s143, 8
      %s145 = scalar_select %p144, %s143, 8
      %s146 = smul.addr %s145, 8
      %s147 = scalar_lea.vmem %s5, %s146
      %s148 = smul.u32 3, %s18
      %p150 = scmp.eq.s32.totalorder %s18, 0
      // Predicated region
      $region25: #{rnn_sequence.1} parent=23 // pred_check
        %p151 = pneg %p150
      $region26: #{rnn_sequence.1} parent=23 // pred_check_branch
        %153 = sbr.rel (%p151) target = $region28
      $region27: #{rnn_sequence.1} parent=23 // pred_region
        // Predicated region
        $region29: #{rnn_sequence.1} parent=27 // pred_check
          _
        $region30: #{rnn_sequence.1} parent=27 // pred_check_branch
          %155 = sbr.rel target = $region32
        $region31: #{rnn_sequence.1} parent=27 // pred_region
          %156 = sst [smem:[#allocation9]] [#allocation8]
          %157 = sst [smem:[#allocation10]] [#allocation7]
        $region32: #{rnn_sequence.1} parent=27 // pred_fallthru
          _
        %159 = shalt.err (0)
        %s161 = sshll.u32 [#allocation2], 4
        %s162 = int_to_ptr.vmem [resolvable:$true] %s161
        %164 = dma.hbm_to_vmem [thread:$0]  %s2, 2048, %s162, [#allocation6]
        %s165 = scalar_lea.sflag [#allocation6], 1
        // Predicated region
        $region33: #{rnn_sequence.1} parent=27 // pred_check
          _
        $region34: #{rnn_sequence.1} parent=27 // pred_check_branch
          %167 = sbr.rel target = $region36
        $region35: #{rnn_sequence.1} parent=27 // pred_region
          %168 = sst [smem:[#allocation9]] [#allocation12]
          %169 = sst [smem:[#allocation10]] [#allocation11]
        $region36: #{rnn_sequence.1} parent=27 // pred_fallthru
          _
        %171 = shalt.err (0)
        %s173 = sshll.u32 [#allocation3], 4
        %s174 = int_to_ptr.vmem [resolvable:$true] %s173
        %176 = dma.hbm_to_vmem [thread:$0]  %s3, 2048, %s174, %s165
        %s177 = scalar_lea.sflag [#allocation6], 2
        %p179 = scmp.lt.u32.totalorder 2, 8
        %p180 = pneg %p179
        // Predicated region
        $region37: #{rnn_sequence.1} parent=27 // pred_check
          _
        $region38: #{rnn_sequence.1} parent=27 // pred_check_branch
          %182 = sbr.rel (%p179) target = $region40
        $region39: #{rnn_sequence.1} parent=27 // pred_region
          %s198 = sand.u32 2, 7
          %p199 = scmp.eq.s32.totalorder %s198, 0
          %p200 = pneg %p199
          // Predicated region
          $region52: #{rnn_sequence.1} parent=39 // pred_check
            _
          $region53: #{rnn_sequence.1} parent=39 // pred_check_branch
            %202 = sbr.rel (%p199) target = $region55
          $region54: #{rnn_sequence.1} parent=39 // pred_region
            %s203 = sand.u32 2, 7
            %s204 = ssub.s32 2, %s203
            %s205 = scalar_lea.vmem %s4, %s204
            %s206 = ssub.s32 2, %s203
            %s207 = scalar_lea.vmem [#allocation4], %s206
            %s208 = sshll.u32 1, %s203
            %s209 = ssub.s32 %s208, 1
            loop: start=0, step=1, limit=1
            $region56: #{rnn_sequence.1} parent=54 // loop_pre_header
              _
            $region57: #{rnn_sequence.1} parent=54 // loop_header
              %s211 = sphi 0, %s215
              %p212 = scmp.ge.s32.totalorder %s211, 1
              %s216 = sphi %s205, %s205
              %s217 = sphi %s207, %s207
            $region58: #{rnn_sequence.1} parent=54 // loop_header_branch
              %214 = sbr.rel (%p212) target = $region62
            $region59: #{rnn_sequence.1} parent=54 // loop_body
              %v218 = vld [vmem:[%s216] sm:%s209]
              %219 = vst [vmem:[%s217] sm:%s209] %v218
            $region60: #{rnn_sequence.1} parent=54 // loop_footer
              %s215 = sadd.s32 1, %s211
            $region61: #{rnn_sequence.1} parent=54 // loop_footer_branch
              %210 = sbr.rel target = $region57
            $region62: #{rnn_sequence.1} parent=54 // loop_exit
              _
          $region55: #{rnn_sequence.1} parent=39 // pred_fallthru
            _
        $region40: #{rnn_sequence.1} parent=27 // pred_fallthru
          _
        // Predicated region
        $region41: #{rnn_sequence.1} parent=27 // pred_check
          %p183 = pneg %p179
        $region42: #{rnn_sequence.1} parent=27 // pred_check_branch
          %185 = sbr.rel (%p183) target = $region44
        $region43: #{rnn_sequence.1} parent=27 // pred_region
          %s186 = sshll.u32 1, 2
          %s187 = ssub.s32 %s186, 1
          loop: start=0, step=1, limit=1
          $region45: #{rnn_sequence.1} parent=43 // loop_pre_header
            _
          $region46: #{rnn_sequence.1} parent=43 // loop_header
            %s189 = sphi 0, %s193
            %p190 = scmp.ge.s32.totalorder %s189, 1
            %s194 = sphi %s4, %s4
            %s195 = sphi [#allocation4], [#allocation4]
          $region47: #{rnn_sequence.1} parent=43 // loop_header_branch
            %192 = sbr.rel (%p190) target = $region51
          $region48: #{rnn_sequence.1} parent=43 // loop_body
            %v196 = vld [vmem:[%s194] sm:%s187]
            %197 = vst [vmem:[%s195] sm:%s187] %v196
          $region49: #{rnn_sequence.1} parent=43 // loop_footer
            %s193 = sadd.s32 1, %s189
          $region50: #{rnn_sequence.1} parent=43 // loop_footer_branch
            %188 = sbr.rel target = $region46
          $region51: #{rnn_sequence.1} parent=43 // loop_exit
            _
        $region44: #{rnn_sequence.1} parent=27 // pred_fallthru
          _
        // Predicated region
        $region63: #{rnn_sequence.1} parent=27 // pred_check
          _
        $region64: #{rnn_sequence.1} parent=27 // pred_check_branch
          %222 = sbr.rel (0) target = $region66
        $region65: #{rnn_sequence.1} parent=27 // pred_region
          %223 = vsyncadd %s177, 32
        $region66: #{rnn_sequence.1} parent=27 // pred_fallthru
          _
        %s224 = scalar_lea.sflag [#allocation6], 3
        %p226 = scmp.lt.u32.totalorder 8, 8
        %p227 = pneg %p226
        // Predicated region
        $region67: #{rnn_sequence.1} parent=27 // pred_check
          _
        $region68: #{rnn_sequence.1} parent=27 // pred_check_branch
          %229 = sbr.rel (%p226) target = $region70
        $region69: #{rnn_sequence.1} parent=27 // pred_region
          %s245 = sand.u32 8, 7
          %p246 = scmp.eq.s32.totalorder %s245, 0
          // Predicated region
          $region82: #{rnn_sequence.1} parent=69 // pred_check
            %p247 = pneg %p246
          $region83: #{rnn_sequence.1} parent=69 // pred_check_branch
            %249 = sbr.rel (%p247) target = $region85
          $region84: #{rnn_sequence.1} parent=69 // pred_region
            loop: start=0, step=1, limit=1
            $region86: #{rnn_sequence.1} parent=84 // loop_pre_header
              _
            $region87: #{rnn_sequence.1} parent=84 // loop_header
              %s251 = sphi 0, %s255
              %p252 = scmp.ge.s32.totalorder %s251, 1
              %s256 = sphi %s1, %s1
              %s257 = sphi [#allocation5], [#allocation5]
            $region88: #{rnn_sequence.1} parent=84 // loop_header_branch
              %254 = sbr.rel (%p252) target = $region92
            $region89: #{rnn_sequence.1} parent=84 // loop_body
              %v258 = vld [vmem:[%s256] sm:$0xff]
              %259 = vst [vmem:[%s257] sm:$0xff] %v258
            $region90: #{rnn_sequence.1} parent=84 // loop_footer
              %s255 = sadd.s32 1, %s251
            $region91: #{rnn_sequence.1} parent=84 // loop_footer_branch
              %250 = sbr.rel target = $region87
            $region92: #{rnn_sequence.1} parent=84 // loop_exit
              _
          $region85: #{rnn_sequence.1} parent=69 // pred_fallthru
            _
          %p260 = pneg %p246
          // Predicated region
          $region93: #{rnn_sequence.1} parent=69 // pred_check
            _
          $region94: #{rnn_sequence.1} parent=69 // pred_check_branch
            %262 = sbr.rel (%p246) target = $region96
          $region95: #{rnn_sequence.1} parent=69 // pred_region
            %s263 = sand.u32 8, 7
          $region96: #{rnn_sequence.1} parent=69 // pred_fallthru
            _
        $region70: #{rnn_sequence.1} parent=27 // pred_fallthru
          _
        // Predicated region
        $region71: #{rnn_sequence.1} parent=27 // pred_check
          %p230 = pneg %p226
        $region72: #{rnn_sequence.1} parent=27 // pred_check_branch
          %232 = sbr.rel (%p230) target = $region74
        $region73: #{rnn_sequence.1} parent=27 // pred_region
          %s233 = sshll.u32 1, 8
          %s234 = ssub.s32 %s233, 1
          loop: start=0, step=1, limit=1
          $region75: #{rnn_sequence.1} parent=73 // loop_pre_header
            _
          $region76: #{rnn_sequence.1} parent=73 // loop_header
            %s236 = sphi 0, %s240
            %p237 = scmp.ge.s32.totalorder %s236, 1
            %s241 = sphi %s1, %s1
            %s242 = sphi [#allocation5], [#allocation5]
          $region77: #{rnn_sequence.1} parent=73 // loop_header_branch
            %239 = sbr.rel (%p237) target = $region81
          $region78: #{rnn_sequence.1} parent=73 // loop_body
            %v243 = vld [vmem:[%s241] sm:%s234]
            %244 = vst [vmem:[%s242] sm:%s234] %v243
          $region79: #{rnn_sequence.1} parent=73 // loop_footer
            %s240 = sadd.s32 1, %s236
          $region80: #{rnn_sequence.1} parent=73 // loop_footer_branch
            %235 = sbr.rel target = $region76
          $region81: #{rnn_sequence.1} parent=73 // loop_exit
            _
        $region74: #{rnn_sequence.1} parent=27 // pred_fallthru
          _
        // Predicated region
        $region97: #{rnn_sequence.1} parent=27 // pred_check
          _
        $region98: #{rnn_sequence.1} parent=27 // pred_check_branch
          %266 = sbr.rel (0) target = $region100
        $region99: #{rnn_sequence.1} parent=27 // pred_region
          %267 = vsyncadd %s224, 128
        $region100: #{rnn_sequence.1} parent=27 // pred_fallthru
          _
        %s268 = smul.u32 4, 16
        %s269 = smul.u32 %s268, 2
        %s270 = sshll.u32 %s269, 4
        %271 = dma.done [#allocation6], %s270
        %s272 = sshll.u32 %s269, 4
        %273 = dma.done %s165, %s272
        %s274 = smul.u32 1, 2
        %s275 = sshll.u32 %s274, 4
        %276 = dma.done %s177, %s275
        %s277 = smul.u32 8, 1
        %s278 = sshll.u32 %s277, 4
        %279 = dma.done %s224, %s278
      $region28: #{rnn_sequence.1} parent=23 // pred_fallthru
        _
      %s280 = smul.u32 %s18, 3
      %v281 = vld [vmem:[#allocation5] sm:$0xff]
      %v282 = vld [vmem:[%s141] sm:$0xf]
      %v283 = vld [vmem:[#allocation2] sm:$0xff]
      %v284 = vld [vmem:[#allocation2 + $0x8] sm:$0xff]
      %v285 = vld [vmem:[#allocation2 + $0x10] sm:$0xff]
      %v286 = vld [vmem:[#allocation2 + $0x18] sm:$0xff]
      %v287 = vld [vmem:[#allocation2 + $0x20] sm:$0xff]
      %v288 = vld [vmem:[#allocation2 + $0x28] sm:$0xff]
      %v289 = vld [vmem:[#allocation2 + $0x30] sm:$0xff]
      %v290 = vld [vmem:[#allocation2 + $0x38] sm:$0xff]
      %v291 = vld [vmem:[#allocation2 + $0x40] sm:$0xff]
      %v292 = vld [vmem:[#allocation2 + $0x48] sm:$0xff]
      %v293 = vld [vmem:[#allocation2 + $0x50] sm:$0xff]
      %v294 = vld [vmem:[#allocation2 + $0x58] sm:$0xff]
      %v295 = vld [vmem:[#allocation2 + $0x60] sm:$0xff]
      %v296 = vld [vmem:[#allocation2 + $0x68] sm:$0xff]
      %v297 = vld [vmem:[#allocation2 + $0x70] sm:$0xff]
      %v298 = vld [vmem:[#allocation2 + $0x78] sm:$0xff]
      %v299 = vpack.c.bf16 %v281, %v281
      %v300 = vld [vmem:[#allocation3] sm:$0xff]
      %v301 = vld [vmem:[#allocation3 + $0x8] sm:$0xff]
      %v302 = vld [vmem:[#allocation3 + $0x10] sm:$0xff]
      %v303 = vld [vmem:[#allocation3 + $0x18] sm:$0xff]
      %v304 = vld [vmem:[#allocation3 + $0x20] sm:$0xff]
      %v305 = vld [vmem:[#allocation3 + $0x28] sm:$0xff]
      %v306 = vld [vmem:[#allocation3 + $0x30] sm:$0xff]
      %v307 = vld [vmem:[#allocation3 + $0x38] sm:$0xff]
      %v308 = vld [vmem:[#allocation3 + $0x40] sm:$0xff]
      %v309 = vld [vmem:[#allocation3 + $0x48] sm:$0xff]
      %v310 = vld [vmem:[#allocation3 + $0x50] sm:$0xff]
      %v311 = vld [vmem:[#allocation3 + $0x58] sm:$0xff]
      %v312 = vld [vmem:[#allocation3 + $0x60] sm:$0xff]
      %v313 = vld [vmem:[#allocation3 + $0x68] sm:$0xff]
      %v314 = vld [vmem:[#allocation3 + $0x70] sm:$0xff]
      %v315 = vld [vmem:[#allocation3 + $0x78] sm:$0xff]
      %v332 = vunpack.c.l.b16 %v300
      %v333 = vunpack.c.h.b16 %v300
      %v334 = vunpack.c.l.b16 %v301
      %v335 = vunpack.c.h.b16 %v301
      %v336 = vunpack.c.l.b16 %v302
      %v337 = vunpack.c.h.b16 %v302
      %v338 = vunpack.c.l.b16 %v303
      %v339 = vunpack.c.h.b16 %v303
      %v340 = vunpack.c.l.b16 %v304
      %v341 = vunpack.c.h.b16 %v304
      %v342 = vunpack.c.l.b16 %v305
      %v343 = vunpack.c.h.b16 %v305
      %v344 = vunpack.c.l.b16 %v306
      %v345 = vunpack.c.h.b16 %v306
      %v346 = vunpack.c.l.b16 %v307
      %v347 = vunpack.c.h.b16 %v307
      %v348 = vunpack.c.l.b16 %v308
      %v349 = vunpack.c.h.b16 %v308
      %v350 = vunpack.c.l.b16 %v309
      %v351 = vunpack.c.h.b16 %v309
      %v352 = vunpack.c.l.b16 %v310
      %v353 = vunpack.c.h.b16 %v310
      %v354 = vunpack.c.l.b16 %v311
      %v355 = vunpack.c.h.b16 %v311
      %v356 = vunpack.c.l.b16 %v312
      %v357 = vunpack.c.h.b16 %v312
      %v358 = vunpack.c.l.b16 %v313
      %v359 = vunpack.c.h.b16 %v313
      %v360 = vunpack.c.l.b16 %v314
      %v361 = vunpack.c.h.b16 %v314
      %v362 = vunpack.c.l.b16 %v315
      %v363 = vunpack.c.h.b16 %v315
      %v364 = vpack.c.b16 %v334, %v332
      %v365 = vpack.c.b16 %v335, %v333
      %v366 = vpack.c.b16 %v338, %v336
      %v367 = vpack.c.b16 %v339, %v337
      %v368 = vpack.c.b16 %v342, %v340
      %v369 = vpack.c.b16 %v343, %v341
      %v370 = vpack.c.b16 %v346, %v344
      %v371 = vpack.c.b16 %v347, %v345
      %v372 = vpack.c.b16 %v350, %v348
      %v373 = vpack.c.b16 %v351, %v349
      %v374 = vpack.c.b16 %v354, %v352
      %v375 = vpack.c.b16 %v355, %v353
      %v376 = vpack.c.b16 %v358, %v356
      %v377 = vpack.c.b16 %v359, %v357
      %v378 = vpack.c.b16 %v362, %v360
      %v379 = vpack.c.b16 %v363, %v361
      %396 = vmatprep.subr.bf16.mxu0 %v379
      %397 = vmatpush1.bf16.msra.mxu0 %v378
      %398 = vmatprep.subr.bf16.mxu0 %v377
      %399 = vmatpush1.bf16.msra.mxu0 %v376
      %400 = vmatprep.subr.bf16.mxu0 %v375
      %401 = vmatpush1.bf16.msra.mxu0 %v374
      %402 = vmatprep.subr.bf16.mxu0 %v373
      %403 = vmatpush1.bf16.msra.mxu0 %v372
      %404 = vmatprep.subr.bf16.mxu0 %v371
      %405 = vmatpush1.bf16.msra.mxu0 %v370
      %406 = vmatprep.subr.bf16.mxu0 %v369
      %407 = vmatpush1.bf16.msra.mxu0 %v368
      %408 = vmatprep.subr.bf16.mxu0 %v367
      %409 = vmatpush1.bf16.msra.mxu0 %v366
      %410 = vmatprep.subr.bf16.mxu0 %v365
      %411 = vmatpush1.bf16.msra.mxu0 %v364
      %412 = vmatprep.subr.bf16.mxu0 0
      %413 = vmatpush2.bf16.msra.mxu0 0
      %414 = vmatprep.subr.bf16.mxu0 0
      %415 = vmatpush2.bf16.msra.mxu0 0
      %416 = vmatprep.subr.bf16.mxu0 0
      %417 = vmatpush2.bf16.msra.mxu0 0
      %418 = vmatprep.subr.bf16.mxu0 0
      %419 = vmatpush2.bf16.msra.mxu0 0
      %420 = vmatprep.subr.bf16.mxu0 0
      %421 = vmatpush2.bf16.msra.mxu0 0
      %422 = vmatprep.subr.bf16.mxu0 0
      %423 = vmatpush2.bf16.msra.mxu0 0
      %424 = vmatprep.subr.bf16.mxu0 0
      %425 = vmatpush2.bf16.msra.mxu0 0
      %426 = vmatprep.subr.bf16.mxu0 0
      %427 = vmatpush2.bf16.msra.mxu0 0
      %428 = vmatprep.mubr.bf16.mxu0 0
      %429 = vmatmul.mubr.bf16.gmra.mxu0 %v299
      %v430 = vpop.f32.mrf.mxu0
      %v431 = vadd.f32 0.0, %v430
      %v432 = vpop.f32.mrf.mxu0
      %v433 = vadd.f32 0.0, %v432
      %v434 = vpop.f32.mrf.mxu0
      %v435 = vpop.f32.mrf.mxu0
      %436 = vdwg.mxu0
      %v453 = vunpack.c.l.b16 %v283
      %v454 = vunpack.c.h.b16 %v283
      %v455 = vunpack.c.l.b16 %v284
      %v456 = vunpack.c.h.b16 %v284
      %v457 = vunpack.c.l.b16 %v285
      %v458 = vunpack.c.h.b16 %v285
      %v459 = vunpack.c.l.b16 %v286
      %v460 = vunpack.c.h.b16 %v286
      %v461 = vunpack.c.l.b16 %v287
      %v462 = vunpack.c.h.b16 %v287
      %v463 = vunpack.c.l.b16 %v288
      %v464 = vunpack.c.h.b16 %v288
      %v465 = vunpack.c.l.b16 %v289
      %v466 = vunpack.c.h.b16 %v289
      %v467 = vunpack.c.l.b16 %v290
      %v468 = vunpack.c.h.b16 %v290
      %v469 = vunpack.c.l.b16 %v291
      %v470 = vunpack.c.h.b16 %v291
      %v471 = vunpack.c.l.b16 %v292
      %v472 = vunpack.c.h.b16 %v292
      %v473 = vunpack.c.l.b16 %v293
      %v474 = vunpack.c.h.b16 %v293
      %v475 = vunpack.c.l.b16 %v294
      %v476 = vunpack.c.h.b16 %v294
      %v477 = vunpack.c.l.b16 %v295
      %v478 = vunpack.c.h.b16 %v295
      %v479 = vunpack.c.l.b16 %v296
      %v480 = vunpack.c.h.b16 %v296
      %v481 = vunpack.c.l.b16 %v297
      %v482 = vunpack.c.h.b16 %v297
      %v483 = vunpack.c.l.b16 %v298
      %v484 = vunpack.c.h.b16 %v298
      %v485 = vpack.c.b16 %v455, %v453
      %v486 = vpack.c.b16 %v456, %v454
      %v487 = vpack.c.b16 %v459, %v457
      %v488 = vpack.c.b16 %v460, %v458
      %v489 = vpack.c.b16 %v463, %v461
      %v490 = vpack.c.b16 %v464, %v462
      %v491 = vpack.c.b16 %v467, %v465
      %v492 = vpack.c.b16 %v468, %v466
      %v493 = vpack.c.b16 %v471, %v469
      %v494 = vpack.c.b16 %v472, %v470
      %v495 = vpack.c.b16 %v475, %v473
      %v496 = vpack.c.b16 %v476, %v474
      %v497 = vpack.c.b16 %v479, %v477
      %v498 = vpack.c.b16 %v480, %v478
      %v499 = vpack.c.b16 %v483, %v481
      %v500 = vpack.c.b16 %v484, %v482
      %517 = vmatprep.subr.bf16.mxu0 %v500
      %518 = vmatpush1.bf16.msra.mxu0 %v499
      %519 = vmatprep.subr.bf16.mxu0 %v498
      %520 = vmatpush1.bf16.msra.mxu0 %v497
      %521 = vmatprep.subr.bf16.mxu0 %v496
      %522 = vmatpush1.bf16.msra.mxu0 %v495
      %523 = vmatprep.subr.bf16.mxu0 %v494
      %524 = vmatpush1.bf16.msra.mxu0 %v493
      %525 = vmatprep.subr.bf16.mxu0 %v492
      %526 = vmatpush1.bf16.msra.mxu0 %v491
      %527 = vmatprep.subr.bf16.mxu0 %v490
      %528 = vmatpush1.bf16.msra.mxu0 %v489
      %529 = vmatprep.subr.bf16.mxu0 %v488
      %530 = vmatpush1.bf16.msra.mxu0 %v487
      %531 = vmatprep.subr.bf16.mxu0 %v486
      %532 = vmatpush1.bf16.msra.mxu0 %v485
      %533 = vmatprep.subr.bf16.mxu0 0
      %534 = vmatpush2.bf16.msra.mxu0 0
      %535 = vmatprep.subr.bf16.mxu0 0
      %536 = vmatpush2.bf16.msra.mxu0 0
      %537 = vmatprep.subr.bf16.mxu0 0
      %538 = vmatpush2.bf16.msra.mxu0 0
      %539 = vmatprep.subr.bf16.mxu0 0
      %540 = vmatpush2.bf16.msra.mxu0 0
      %541 = vmatprep.subr.bf16.mxu0 0
      %542 = vmatpush2.bf16.msra.mxu0 0
      %543 = vmatprep.subr.bf16.mxu0 0
      %544 = vmatpush2.bf16.msra.mxu0 0
      %545 = vmatprep.subr.bf16.mxu0 0
      %546 = vmatpush2.bf16.msra.mxu0 0
      %547 = vmatprep.subr.bf16.mxu0 0
      %548 = vmatpush2.bf16.msra.mxu0 0
      %549 = vmatprep.mubr.bf16.mxu0 0
      %550 = vmatmul.mubr.bf16.gmra.mxu0 %v282
      %v551 = vpop.f32.mrf.mxu0
      %v552 = vadd.f32 %v431, %v551
      %v553 = vpop.f32.mrf.mxu0
      %v554 = vadd.f32 %v433, %v553
      %v555 = vpop.f32.mrf.mxu0
      %v556 = vpop.f32.mrf.mxu0
      %557 = vdwg.mxu0
      %v558 = vld [vmem:[#allocation4] sm:$0x3]
      %v560 = vlaneseq
      %v561 = vshrl.u32 %v560, 7
      %v562 = vsub.s32 0, %v561
      %v563 = vrot.slane %v558, %v562
      %v564 = vlaneseq
      %v565 = vshrl.u32 %v564, 7
      %v566 = vsub.s32 1, %v565
      %v567 = vrot.slane %v558, %v566
      %v570 = vadd.f32 %v552, %v563
      %v571 = vadd.f32 %v554, %v567
      %572 = vmax.xlane.f32.xlu0 %v571
      %v573 = vpop.xlane.xlu0 %572
      %v574 = vsub.f32 %v571, %v573
      %v575 = vmul.f32 %v574, 1.442695
      %v576 = vpow.pop %v575
      %577 = vadd.xlane.f32.xlu0 %v576
      %v578 = vpop.xlane.xlu0 %577
      %v579 = vlog2.pop %v578
      %v580 = vmul.f32 %v579, 0.6931472
      %v581 = vsub.f32 %v574, %v580
      %582 = vst [vmem:[%s147] sm:$0xff] %v581
      %p583 = scmp.lt.s32.totalorder %s280, 8
      %s584 = scalar_select %p583, 1, 0
      %v585 = vstv %s584
      %vm586 = vcmp.eq.s32.totalorder %v585, 1
      %v587 = vsel %vm586, %v570, %v281
      %s588 = scalar_lea.vmem %s141, 4
      %v589 = vld [vmem:[%s588] sm:$0xf]
      %v590 = vld [vmem:[#allocation2] sm:$0xff]
      %v591 = vld [vmem:[#allocation2 + $0x8] sm:$0xff]
      %v592 = vld [vmem:[#allocation2 + $0x10] sm:$0xff]
      %v593 = vld [vmem:[#allocation2 + $0x18] sm:$0xff]
      %v594 = vld [vmem:[#allocation2 + $0x20] sm:$0xff]
      %v595 = vld [vmem:[#allocation2 + $0x28] sm:$0xff]
      %v596 = vld [vmem:[#allocation2 + $0x30] sm:$0xff]
      %v597 = vld [vmem:[#allocation2 + $0x38] sm:$0xff]
      %v598 = vld [vmem:[#allocation2 + $0x40] sm:$0xff]
      %v599 = vld [vmem:[#allocation2 + $0x48] sm:$0xff]
      %v600 = vld [vmem:[#allocation2 + $0x50] sm:$0xff]
      %v601 = vld [vmem:[#allocation2 + $0x58] sm:$0xff]
      %v602 = vld [vmem:[#allocation2 + $0x60] sm:$0xff]
      %v603 = vld [vmem:[#allocation2 + $0x68] sm:$0xff]
      %v604 = vld [vmem:[#allocation2 + $0x70] sm:$0xff]
      %v605 = vld [vmem:[#allocation2 + $0x78] sm:$0xff]
      %v606 = vpack.c.bf16 %v587, %v587
      %v607 = vld [vmem:[#allocation3] sm:$0xff]
      %v608 = vld [vmem:[#allocation3 + $0x8] sm:$0xff]
      %v609 = vld [vmem:[#allocation3 + $0x10] sm:$0xff]
      %v610 = vld [vmem:[#allocation3 + $0x18] sm:$0xff]
      %v611 = vld [vmem:[#allocation3 + $0x20] sm:$0xff]
      %v612 = vld [vmem:[#allocation3 + $0x28] sm:$0xff]
      %v613 = vld [vmem:[#allocation3 + $0x30] sm:$0xff]
      %v614 = vld [vmem:[#allocation3 + $0x38] sm:$0xff]
      %v615 = vld [vmem:[#allocation3 + $0x40] sm:$0xff]
      %v616 = vld [vmem:[#allocation3 + $0x48] sm:$0xff]
      %v617 = vld [vmem:[#allocation3 + $0x50] sm:$0xff]
      %v618 = vld [vmem:[#allocation3 + $0x58] sm:$0xff]
      %v619 = vld [vmem:[#allocation3 + $0x60] sm:$0xff]
      %v620 = vld [vmem:[#allocation3 + $0x68] sm:$0xff]
      %v621 = vld [vmem:[#allocation3 + $0x70] sm:$0xff]
      %v622 = vld [vmem:[#allocation3 + $0x78] sm:$0xff]
      %v639 = vunpack.c.l.b16 %v607
      %v640 = vunpack.c.h.b16 %v607
      %v641 = vunpack.c.l.b16 %v608
      %v642 = vunpack.c.h.b16 %v608
      %v643 = vunpack.c.l.b16 %v609
      %v644 = vunpack.c.h.b16 %v609
      %v645 = vunpack.c.l.b16 %v610
      %v646 = vunpack.c.h.b16 %v610
      %v647 = vunpack.c.l.b16 %v611
      %v648 = vunpack.c.h.b16 %v611
      %v649 = vunpack.c.l.b16 %v612
      %v650 = vunpack.c.h.b16 %v612
      %v651 = vunpack.c.l.b16 %v613
      %v652 = vunpack.c.h.b16 %v613
      %v653 = vunpack.c.l.b16 %v614
      %v654 = vunpack.c.h.b16 %v614
      %v655 = vunpack.c.l.b16 %v615
      %v656 = vunpack.c.h.b16 %v615
      %v657 = vunpack.c.l.b16 %v616
      %v658 = vunpack.c.h.b16 %v616
      %v659 = vunpack.c.l.b16 %v617
      %v660 = vunpack.c.h.b16 %v617
      %v661 = vunpack.c.l.b16 %v618
      %v662 = vunpack.c.h.b16 %v618
      %v663 = vunpack.c.l.b16 %v619
      %v664 = vunpack.c.h.b16 %v619
      %v665 = vunpack.c.l.b16 %v620
      %v666 = vunpack.c.h.b16 %v620
      %v667 = vunpack.c.l.b16 %v621
      %v668 = vunpack.c.h.b16 %v621
      %v669 = vunpack.c.l.b16 %v622
      %v670 = vunpack.c.h.b16 %v622
      %v671 = vpack.c.b16 %v641, %v639
      %v672 = vpack.c.b16 %v642, %v640
      %v673 = vpack.c.b16 %v645, %v643
      %v674 = vpack.c.b16 %v646, %v644
      %v675 = vpack.c.b16 %v649, %v647
      %v676 = vpack.c.b16 %v650, %v648
      %v677 = vpack.c.b16 %v653, %v651
      %v678 = vpack.c.b16 %v654, %v652
      %v679 = vpack.c.b16 %v657, %v655
      %v680 = vpack.c.b16 %v658, %v656
      %v681 = vpack.c.b16 %v661, %v659
      %v682 = vpack.c.b16 %v662, %v660
      %v683 = vpack.c.b16 %v665, %v663
      %v684 = vpack.c.b16 %v666, %v664
      %v685 = vpack.c.b16 %v669, %v667
      %v686 = vpack.c.b16 %v670, %v668
      %703 = vmatprep.subr.bf16.mxu0 %v686
      %704 = vmatpush1.bf16.msra.mxu0 %v685
      %705 = vmatprep.subr.bf16.mxu0 %v684
      %706 = vmatpush1.bf16.msra.mxu0 %v683
      %707 = vmatprep.subr.bf16.mxu0 %v682
      %708 = vmatpush1.bf16.msra.mxu0 %v681
      %709 = vmatprep.subr.bf16.mxu0 %v680
      %710 = vmatpush1.bf16.msra.mxu0 %v679
      %711 = vmatprep.subr.bf16.mxu0 %v678
      %712 = vmatpush1.bf16.msra.mxu0 %v677
      %713 = vmatprep.subr.bf16.mxu0 %v676
      %714 = vmatpush1.bf16.msra.mxu0 %v675
      %715 = vmatprep.subr.bf16.mxu0 %v674
      %716 = vmatpush1.bf16.msra.mxu0 %v673
      %717 = vmatprep.subr.bf16.mxu0 %v672
      %718 = vmatpush1.bf16.msra.mxu0 %v671
      %719 = vmatprep.subr.bf16.mxu0 0
      %720 = vmatpush2.bf16.msra.mxu0 0
      %721 = vmatprep.subr.bf16.mxu0 0
      %722 = vmatpush2.bf16.msra.mxu0 0
      %723 = vmatprep.subr.bf16.mxu0 0
      %724 = vmatpush2.bf16.msra.mxu0 0
      %725 = vmatprep.subr.bf16.mxu0 0
      %726 = vmatpush2.bf16.msra.mxu0 0
      %727 = vmatprep.subr.bf16.mxu0 0
      %728 = vmatpush2.bf16.msra.mxu0 0
      %729 = vmatprep.subr.bf16.mxu0 0
      %730 = vmatpush2.bf16.msra.mxu0 0
      %731 = vmatprep.subr.bf16.mxu0 0
      %732 = vmatpush2.bf16.msra.mxu0 0
      %733 = vmatprep.subr.bf16.mxu0 0
      %734 = vmatpush2.bf16.msra.mxu0 0
      %735 = vmatprep.mubr.bf16.mxu0 0
      %736 = vmatmul.mubr.bf16.gmra.mxu0 %v606
      %v737 = vpop.f32.mrf.mxu0
      %v738 = vadd.f32 0.0, %v737
      %v739 = vpop.f32.mrf.mxu0
      %v740 = vadd.f32 0.0, %v739
      %v741 = vpop.f32.mrf.mxu0
      %v742 = vpop.f32.mrf.mxu0
      %743 = vdwg.mxu0
      %v760 = vunpack.c.l.b16 %v590
      %v761 = vunpack.c.h.b16 %v590
      %v762 = vunpack.c.l.b16 %v591
      %v763 = vunpack.c.h.b16 %v591
      %v764 = vunpack.c.l.b16 %v592
      %v765 = vunpack.c.h.b16 %v592
      %v766 = vunpack.c.l.b16 %v593
      %v767 = vunpack.c.h.b16 %v593
      %v768 = vunpack.c.l.b16 %v594
      %v769 = vunpack.c.h.b16 %v594
      %v770 = vunpack.c.l.b16 %v595
      %v771 = vunpack.c.h.b16 %v595
      %v772 = vunpack.c.l.b16 %v596
      %v773 = vunpack.c.h.b16 %v596
      %v774 = vunpack.c.l.b16 %v597
      %v775 = vunpack.c.h.b16 %v597
      %v776 = vunpack.c.l.b16 %v598
      %v777 = vunpack.c.h.b16 %v598
      %v778 = vunpack.c.l.b16 %v599
      %v779 = vunpack.c.h.b16 %v599
      %v780 = vunpack.c.l.b16 %v600
      %v781 = vunpack.c.h.b16 %v600
      %v782 = vunpack.c.l.b16 %v601
      %v783 = vunpack.c.h.b16 %v601
      %v784 = vunpack.c.l.b16 %v602
      %v785 = vunpack.c.h.b16 %v602
      %v786 = vunpack.c.l.b16 %v603
      %v787 = vunpack.c.h.b16 %v603
      %v788 = vunpack.c.l.b16 %v604
      %v789 = vunpack.c.h.b16 %v604
      %v790 = vunpack.c.l.b16 %v605
      %v791 = vunpack.c.h.b16 %v605
      %v792 = vpack.c.b16 %v762, %v760
      %v793 = vpack.c.b16 %v763, %v761
      %v794 = vpack.c.b16 %v766, %v764
      %v795 = vpack.c.b16 %v767, %v765
      %v796 = vpack.c.b16 %v770, %v768
      %v797 = vpack.c.b16 %v771, %v769
      %v798 = vpack.c.b16 %v774, %v772
      %v799 = vpack.c.b16 %v775, %v773
      %v800 = vpack.c.b16 %v778, %v776
      %v801 = vpack.c.b16 %v779, %v777
      %v802 = vpack.c.b16 %v782, %v780
      %v803 = vpack.c.b16 %v783, %v781
      %v804 = vpack.c.b16 %v786, %v784
      %v805 = vpack.c.b16 %v787, %v785
      %v806 = vpack.c.b16 %v790, %v788
      %v807 = vpack.c.b16 %v791, %v789
      %824 = vmatprep.subr.bf16.mxu0 %v807
      %825 = vmatpush1.bf16.msra.mxu0 %v806
      %826 = vmatprep.subr.bf16.mxu0 %v805
      %827 = vmatpush1.bf16.msra.mxu0 %v804
      %828 = vmatprep.subr.bf16.mxu0 %v803
      %829 = vmatpush1.bf16.msra.mxu0 %v802
      %830 = vmatprep.subr.bf16.mxu0 %v801
      %831 = vmatpush1.bf16.msra.mxu0 %v800
      %832 = vmatprep.subr.bf16.mxu0 %v799
      %833 = vmatpush1.bf16.msra.mxu0 %v798
      %834 = vmatprep.subr.bf16.mxu0 %v797
      %835 = vmatpush1.bf16.msra.mxu0 %v796
      %836 = vmatprep.subr.bf16.mxu0 %v795
      %837 = vmatpush1.bf16.msra.mxu0 %v794
      %838 = vmatprep.subr.bf16.mxu0 %v793
      %839 = vmatpush1.bf16.msra.mxu0 %v792
      %840 = vmatprep.subr.bf16.mxu0 0
      %841 = vmatpush2.bf16.msra.mxu0 0
      %842 = vmatprep.subr.bf16.mxu0 0
      %843 = vmatpush2.bf16.msra.mxu0 0
      %844 = vmatprep.subr.bf16.mxu0 0
      %845 = vmatpush2.bf16.msra.mxu0 0
      %846 = vmatprep.subr.bf16.mxu0 0
      %847 = vmatpush2.bf16.msra.mxu0 0
      %848 = vmatprep.subr.bf16.mxu0 0
      %849 = vmatpush2.bf16.msra.mxu0 0
      %850 = vmatprep.subr.bf16.mxu0 0
      %851 = vmatpush2.bf16.msra.mxu0 0
      %852 = vmatprep.subr.bf16.mxu0 0
      %853 = vmatpush2.bf16.msra.mxu0 0
      %854 = vmatprep.subr.bf16.mxu0 0
      %855 = vmatpush2.bf16.msra.mxu0 0
      %856 = vmatprep.mubr.bf16.mxu0 0
      %857 = vmatmul.mubr.bf16.gmra.mxu0 %v589
      %v858 = vpop.f32.mrf.mxu0
      %v859 = vadd.f32 %v738, %v858
      %v860 = vpop.f32.mrf.mxu0
      %v861 = vadd.f32 %v740, %v860
      %v862 = vpop.f32.mrf.mxu0
      %v863 = vpop.f32.mrf.mxu0
      %864 = vdwg.mxu0
      %v865 = vld [vmem:[#allocation4] sm:$0x3]
      %v867 = vlaneseq
      %v868 = vshrl.u32 %v867, 7
      %v869 = vsub.s32 0, %v868
      %v870 = vrot.slane %v865, %v869
      %v871 = vlaneseq
      %v872 = vshrl.u32 %v871, 7
      %v873 = vsub.s32 1, %v872
      %v874 = vrot.slane %v865, %v873
      %v877 = vadd.f32 %v859, %v870
      %v878 = vadd.f32 %v861, %v874
      %879 = vmax.xlane.f32.xlu0 %v878
      %v880 = vpop.xlane.xlu0 %879
      %v881 = vsub.f32 %v878, %v880
      %v882 = vmul.f32 %v881, 1.442695
      %v883 = vpow.pop %v882
      %884 = vadd.xlane.f32.xlu0 %v883
      %v885 = vpop.xlane.xlu0 %884
      %v886 = vlog2.pop %v885
      %v887 = vmul.f32 %v886, 0.6931472
      %v888 = vsub.f32 %v881, %v887
      %s889 = scalar_lea.vmem %s147, 8
      %890 = vst [vmem:[%s889] sm:$0xff] %v888
      %s891 = sadd.s32 %s280, 1
      %p892 = scmp.lt.s32.totalorder %s891, 8
      %s893 = scalar_select %p892, 1, 0
      %v894 = vstv %s893
      %vm895 = vcmp.eq.s32.totalorder %v894, 1
      %v896 = vsel %vm895, %v877, %v587
      %s897 = scalar_lea.vmem %s141, 8
      %v898 = vld [vmem:[%s897] sm:$0xf]
      %v899 = vld [vmem:[#allocation2] sm:$0xff]
      %v900 = vld [vmem:[#allocation2 + $0x8] sm:$0xff]
      %v901 = vld [vmem:[#allocation2 + $0x10] sm:$0xff]
      %v902 = vld [vmem:[#allocation2 + $0x18] sm:$0xff]
      %v903 = vld [vmem:[#allocation2 + $0x20] sm:$0xff]
      %v904 = vld [vmem:[#allocation2 + $0x28] sm:$0xff]
      %v905 = vld [vmem:[#allocation2 + $0x30] sm:$0xff]
      %v906 = vld [vmem:[#allocation2 + $0x38] sm:$0xff]
      %v907 = vld [vmem:[#allocation2 + $0x40] sm:$0xff]
      %v908 = vld [vmem:[#allocation2 + $0x48] sm:$0xff]
      %v909 = vld [vmem:[#allocation2 + $0x50] sm:$0xff]
      %v910 = vld [vmem:[#allocation2 + $0x58] sm:$0xff]
      %v911 = vld [vmem:[#allocation2 + $0x60] sm:$0xff]
      %v912 = vld [vmem:[#allocation2 + $0x68] sm:$0xff]
      %v913 = vld [vmem:[#allocation2 + $0x70] sm:$0xff]
      %v914 = vld [vmem:[#allocation2 + $0x78] sm:$0xff]
      %v915 = vpack.c.bf16 %v896, %v896
      %v916 = vld [vmem:[#allocation3] sm:$0xff]
      %v917 = vld [vmem:[#allocation3 + $0x8] sm:$0xff]
      %v918 = vld [vmem:[#allocation3 + $0x10] sm:$0xff]
      %v919 = vld [vmem:[#allocation3 + $0x18] sm:$0xff]
      %v920 = vld [vmem:[#allocation3 + $0x20] sm:$0xff]
      %v921 = vld [vmem:[#allocation3 + $0x28] sm:$0xff]
      %v922 = vld [vmem:[#allocation3 + $0x30] sm:$0xff]
      %v923 = vld [vmem:[#allocation3 + $0x38] sm:$0xff]
      %v924 = vld [vmem:[#allocation3 + $0x40] sm:$0xff]
      %v925 = vld [vmem:[#allocation3 + $0x48] sm:$0xff]
      %v926 = vld [vmem:[#allocation3 + $0x50] sm:$0xff]
      %v927 = vld [vmem:[#allocation3 + $0x58] sm:$0xff]
      %v928 = vld [vmem:[#allocation3 + $0x60] sm:$0xff]
      %v929 = vld [vmem:[#allocation3 + $0x68] sm:$0xff]
      %v930 = vld [vmem:[#allocation3 + $0x70] sm:$0xff]
      %v931 = vld [vmem:[#allocation3 + $0x78] sm:$0xff]
      %v948 = vunpack.c.l.b16 %v916
      %v949 = vunpack.c.h.b16 %v916
      %v950 = vunpack.c.l.b16 %v917
      %v951 = vunpack.c.h.b16 %v917
      %v952 = vunpack.c.l.b16 %v918
      %v953 = vunpack.c.h.b16 %v918
      %v954 = vunpack.c.l.b16 %v919
      %v955 = vunpack.c.h.b16 %v919
      %v956 = vunpack.c.l.b16 %v920
      %v957 = vunpack.c.h.b16 %v920
      %v958 = vunpack.c.l.b16 %v921
      %v959 = vunpack.c.h.b16 %v921
      %v960 = vunpack.c.l.b16 %v922
      %v961 = vunpack.c.h.b16 %v922
      %v962 = vunpack.c.l.b16 %v923
      %v963 = vunpack.c.h.b16 %v923
      %v964 = vunpack.c.l.b16 %v924
      %v965 = vunpack.c.h.b16 %v924
      %v966 = vunpack.c.l.b16 %v925
      %v967 = vunpack.c.h.b16 %v925
      %v968 = vunpack.c.l.b16 %v926
      %v969 = vunpack.c.h.b16 %v926
      %v970 = vunpack.c.l.b16 %v927
      %v971 = vunpack.c.h.b16 %v927
      %v972 = vunpack.c.l.b16 %v928
      %v973 = vunpack.c.h.b16 %v928
      %v974 = vunpack.c.l.b16 %v929
      %v975 = vunpack.c.h.b16 %v929
      %v976 = vunpack.c.l.b16 %v930
      %v977 = vunpack.c.h.b16 %v930
      %v978 = vunpack.c.l.b16 %v931
      %v979 = vunpack.c.h.b16 %v931
      %v980 = vpack.c.b16 %v950, %v948
      %v981 = vpack.c.b16 %v951, %v949
      %v982 = vpack.c.b16 %v954, %v952
      %v983 = vpack.c.b16 %v955, %v953
      %v984 = vpack.c.b16 %v958, %v956
      %v985 = vpack.c.b16 %v959, %v957
      %v986 = vpack.c.b16 %v962, %v960
      %v987 = vpack.c.b16 %v963, %v961
      %v988 = vpack.c.b16 %v966, %v964
      %v989 = vpack.c.b16 %v967, %v965
      %v990 = vpack.c.b16 %v970, %v968
      %v991 = vpack.c.b16 %v971, %v969
      %v992 = vpack.c.b16 %v974, %v972
      %v993 = vpack.c.b16 %v975, %v973
      %v994 = vpack.c.b16 %v978, %v976
      %v995 = vpack.c.b16 %v979, %v977
      %1012 = vmatprep.subr.bf16.mxu0 %v995
      %1013 = vmatpush1.bf16.msra.mxu0 %v994
      %1014 = vmatprep.subr.bf16.mxu0 %v993
      %1015 = vmatpush1.bf16.msra.mxu0 %v992
      %1016 = vmatprep.subr.bf16.mxu0 %v991
      %1017 = vmatpush1.bf16.msra.mxu0 %v990
      %1018 = vmatprep.subr.bf16.mxu0 %v989
      %1019 = vmatpush1.bf16.msra.mxu0 %v988
      %1020 = vmatprep.subr.bf16.mxu0 %v987
      %1021 = vmatpush1.bf16.msra.mxu0 %v986
      %1022 = vmatprep.subr.bf16.mxu0 %v985
      %1023 = vmatpush1.bf16.msra.mxu0 %v984
      %1024 = vmatprep.subr.bf16.mxu0 %v983
      %1025 = vmatpush1.bf16.msra.mxu0 %v982
      %1026 = vmatprep.subr.bf16.mxu0 %v981
      %1027 = vmatpush1.bf16.msra.mxu0 %v980
      %1028 = vmatprep.subr.bf16.mxu0 0
      %1029 = vmatpush2.bf16.msra.mxu0 0
      %1030 = vmatprep.subr.bf16.mxu0 0
      %1031 = vmatpush2.bf16.msra.mxu0 0
      %1032 = vmatprep.subr.bf16.mxu0 0
      %1033 = vmatpush2.bf16.msra.mxu0 0
      %1034 = vmatprep.subr.bf16.mxu0 0
      %1035 = vmatpush2.bf16.msra.mxu0 0
      %1036 = vmatprep.subr.bf16.mxu0 0
      %1037 = vmatpush2.bf16.msra.mxu0 0
      %1038 = vmatprep.subr.bf16.mxu0 0
      %1039 = vmatpush2.bf16.msra.mxu0 0
      %1040 = vmatprep.subr.bf16.mxu0 0
      %1041 = vmatpush2.bf16.msra.mxu0 0
      %1042 = vmatprep.subr.bf16.mxu0 0
      %1043 = vmatpush2.bf16.msra.mxu0 0
      %1044 = vmatprep.mubr.bf16.mxu0 0
      %1045 = vmatmul.mubr.bf16.gmra.mxu0 %v915
      %v1046 = vpop.f32.mrf.mxu0
      %v1047 = vadd.f32 0.0, %v1046
      %v1048 = vpop.f32.mrf.mxu0
      %v1049 = vadd.f32 0.0, %v1048
      %v1050 = vpop.f32.mrf.mxu0
      %v1051 = vpop.f32.mrf.mxu0
      %1052 = vdwg.mxu0
      %v1069 = vunpack.c.l.b16 %v899
      %v1070 = vunpack.c.h.b16 %v899
      %v1071 = vunpack.c.l.b16 %v900
      %v1072 = vunpack.c.h.b16 %v900
      %v1073 = vunpack.c.l.b16 %v901
      %v1074 = vunpack.c.h.b16 %v901
      %v1075 = vunpack.c.l.b16 %v902
      %v1076 = vunpack.c.h.b16 %v902
      %v1077 = vunpack.c.l.b16 %v903
      %v1078 = vunpack.c.h.b16 %v903
      %v1079 = vunpack.c.l.b16 %v904
      %v1080 = vunpack.c.h.b16 %v904
      %v1081 = vunpack.c.l.b16 %v905
      %v1082 = vunpack.c.h.b16 %v905
      %v1083 = vunpack.c.l.b16 %v906
      %v1084 = vunpack.c.h.b16 %v906
      %v1085 = vunpack.c.l.b16 %v907
      %v1086 = vunpack.c.h.b16 %v907
      %v1087 = vunpack.c.l.b16 %v908
      %v1088 = vunpack.c.h.b16 %v908
      %v1089 = vunpack.c.l.b16 %v909
      %v1090 = vunpack.c.h.b16 %v909
      %v1091 = vunpack.c.l.b16 %v910
      %v1092 = vunpack.c.h.b16 %v910
      %v1093 = vunpack.c.l.b16 %v911
      %v1094 = vunpack.c.h.b16 %v911
      %v1095 = vunpack.c.l.b16 %v912
      %v1096 = vunpack.c.h.b16 %v912
      %v1097 = vunpack.c.l.b16 %v913
      %v1098 = vunpack.c.h.b16 %v913
      %v1099 = vunpack.c.l.b16 %v914
      %v1100 = vunpack.c.h.b16 %v914
      %v1101 = vpack.c.b16 %v1071, %v1069
      %v1102 = vpack.c.b16 %v1072, %v1070
      %v1103 = vpack.c.b16 %v1075, %v1073
      %v1104 = vpack.c.b16 %v1076, %v1074
      %v1105 = vpack.c.b16 %v1079, %v1077
      %v1106 = vpack.c.b16 %v1080, %v1078
      %v1107 = vpack.c.b16 %v1083, %v1081
      %v1108 = vpack.c.b16 %v1084, %v1082
      %v1109 = vpack.c.b16 %v1087, %v1085
      %v1110 = vpack.c.b16 %v1088, %v1086
      %v1111 = vpack.c.b16 %v1091, %v1089
      %v1112 = vpack.c.b16 %v1092, %v1090
      %v1113 = vpack.c.b16 %v1095, %v1093
      %v1114 = vpack.c.b16 %v1096, %v1094
      %v1115 = vpack.c.b16 %v1099, %v1097
      %v1116 = vpack.c.b16 %v1100, %v1098
      %1133 = vmatprep.subr.bf16.mxu0 %v1116
      %1134 = vmatpush1.bf16.msra.mxu0 %v1115
      %1135 = vmatprep.subr.bf16.mxu0 %v1114
      %1136 = vmatpush1.bf16.msra.mxu0 %v1113
      %1137 = vmatprep.subr.bf16.mxu0 %v1112
      %1138 = vmatpush1.bf16.msra.mxu0 %v1111
      %1139 = vmatprep.subr.bf16.mxu0 %v1110
      %1140 = vmatpush1.bf16.msra.mxu0 %v1109
      %1141 = vmatprep.subr.bf16.mxu0 %v1108
      %1142 = vmatpush1.bf16.msra.mxu0 %v1107
      %1143 = vmatprep.subr.bf16.mxu0 %v1106
      %1144 = vmatpush1.bf16.msra.mxu0 %v1105
      %1145 = vmatprep.subr.bf16.mxu0 %v1104
      %1146 = vmatpush1.bf16.msra.mxu0 %v1103
      %1147 = vmatprep.subr.bf16.mxu0 %v1102
      %1148 = vmatpush1.bf16.msra.mxu0 %v1101
      %1149 = vmatprep.subr.bf16.mxu0 0
      %1150 = vmatpush2.bf16.msra.mxu0 0
      %1151 = vmatprep.subr.bf16.mxu0 0
      %1152 = vmatpush2.bf16.msra.mxu0 0
      %1153 = vmatprep.subr.bf16.mxu0 0
      %1154 = vmatpush2.bf16.msra.mxu0 0
      %1155 = vmatprep.subr.bf16.mxu0 0
      %1156 = vmatpush2.bf16.msra.mxu0 0
      %1157 = vmatprep.subr.bf16.mxu0 0
      %1158 = vmatpush2.bf16.msra.mxu0 0
      %1159 = vmatprep.subr.bf16.mxu0 0
      %1160 = vmatpush2.bf16.msra.mxu0 0
      %1161 = vmatprep.subr.bf16.mxu0 0
      %1162 = vmatpush2.bf16.msra.mxu0 0
      %1163 = vmatprep.subr.bf16.mxu0 0
      %1164 = vmatpush2.bf16.msra.mxu0 0
      %1165 = vmatprep.mubr.bf16.mxu0 0
      %1166 = vmatmul.mubr.bf16.gmra.mxu0 %v898
      %v1167 = vpop.f32.mrf.mxu0
      %v1168 = vadd.f32 %v1047, %v1167
      %v1169 = vpop.f32.mrf.mxu0
      %v1170 = vadd.f32 %v1049, %v1169
      %v1171 = vpop.f32.mrf.mxu0
      %v1172 = vpop.f32.mrf.mxu0
      %1173 = vdwg.mxu0
      %v1174 = vld [vmem:[#allocation4] sm:$0x3]
      %v1176 = vlaneseq
      %v1177 = vshrl.u32 %v1176, 7
      %v1178 = vsub.s32 0, %v1177
      %v1179 = vrot.slane %v1174, %v1178
      %v1180 = vlaneseq
      %v1181 = vshrl.u32 %v1180, 7
      %v1182 = vsub.s32 1, %v1181
      %v1183 = vrot.slane %v1174, %v1182
      %v1186 = vadd.f32 %v1168, %v1179
      %v1187 = vadd.f32 %v1170, %v1183
      %1188 = vmax.xlane.f32.xlu0 %v1187
      %v1189 = vpop.xlane.xlu0 %1188
      %v1190 = vsub.f32 %v1187, %v1189
      %v1191 = vmul.f32 %v1190, 1.442695
      %v1192 = vpow.pop %v1191
      %1193 = vadd.xlane.f32.xlu0 %v1192
      %v1194 = vpop.xlane.xlu0 %1193
      %v1195 = vlog2.pop %v1194
      %v1196 = vmul.f32 %v1195, 0.6931472
      %v1197 = vsub.f32 %v1190, %v1196
      %s1198 = scalar_lea.vmem %s147, 16
      %1199 = vst [vmem:[%s1198] sm:$0xff] %v1197
      %s1200 = sadd.s32 %s280, 2
      %p1201 = scmp.lt.s32.totalorder %s1200, 8
      %s1202 = scalar_select %p1201, 1, 0
      %v1203 = vstv %s1202
      %vm1204 = vcmp.eq.s32.totalorder %v1203, 1
      %v1205 = vsel %vm1204, %v1186, %v896
      %1206 = vst [vmem:[#allocation5] sm:$0xff] %v1205
      %p1207 = scmp.eq.s32.totalorder %s18, 2
      // Predicated region
      $region101: #{rnn_sequence.1} parent=23 // pred_check
        %p1208 = pneg %p1207
      $region102: #{rnn_sequence.1} parent=23 // pred_check_branch
        %1210 = sbr.rel (%p1208) target = $region104
      $region103: #{rnn_sequence.1} parent=23 // pred_region
        %1211 = vst [vmem:[%s6] sm:$0xff] %v1205
      $region104: #{rnn_sequence.1} parent=23 // pred_fallthru
        _
      %s1212 = smul.u32 3, %s18
      %p1213 = scmp.lt.s32.totalorder %s1212, 8
      %s1214 = scalar_select %p1213, %s1212, 8
      %s1215 = smul.addr %s1214, 8
      %s1216 = scalar_lea.vmem %s5, %s1215
      // Predicated region
      $region105: #{rnn_sequence.1} parent=23 // pred_check
        %p1217 = pneg %p62
      $region106: #{rnn_sequence.1} parent=23 // pred_check_branch
        %1219 = sbr.rel (%p1217) target = $region108
      $region107: #{rnn_sequence.1} parent=23 // pred_region
        %s1220 = smul.u32 3, %s18
      $region108: #{rnn_sequence.1} parent=23 // pred_fallthru
        _
      // Predicated region
      $region109: #{rnn_sequence.1} parent=23 // pred_check
        %p1221 = pneg %p83
      $region110: #{rnn_sequence.1} parent=23 // pred_check_branch
        %1223 = sbr.rel (%p1221) target = $region112
      $region111: #{rnn_sequence.1} parent=23 // pred_region
        _
      $region112: #{rnn_sequence.1} parent=23 // pred_fallthru
        _
      // Predicated region
      $region113: #{rnn_sequence.1} parent=23 // pred_check
        %p1224 = pneg %p83
      $region114: #{rnn_sequence.1} parent=23 // pred_check_branch
        %1226 = sbr.rel (%p1224) target = $region116
      $region115: #{rnn_sequence.1} parent=23 // pred_region
        _
      $region116: #{rnn_sequence.1} parent=23 // pred_fallthru
        _
    $region24: #{rnn_sequence.1} parent=5 // pred_fallthru
      _
    %p1227 = scmp.le.s32.totalorder 2, %s13
    // Predicated region
    $region117: #{rnn_sequence.1} parent=5 // pred_check
      %p1228 = pneg %p1227
    $region118: #{rnn_sequence.1} parent=5 // pred_check_branch
      %1230 = sbr.rel (%p1228) target = $region120
    $region119: #{rnn_sequence.1} parent=5 // pred_region
      %s1231 = ssub.s32 %s13, 2
      // Predicated region
      $region121: #{rnn_sequence.1} parent=119 // pred_check
        %p1232 = pneg %p68
      $region122: #{rnn_sequence.1} parent=119 // pred_check_branch
        %1234 = sbr.rel (%p1232) target = $region124
      $region123: #{rnn_sequence.1} parent=119 // pred_region
        %s1235 = smul.u32 3, %s19
        %p1236 = scmp.lt.s32.totalorder %s1235, 8
        %s1237 = scalar_select %p1236, %s1235, 8
        %s1238 = smul.addr %s1237, 8
        %s1239 = scalar_lea.vmem %s5, %s1238
      $region124: #{rnn_sequence.1} parent=119 // pred_fallthru
        _
    $region120: #{rnn_sequence.1} parent=5 // pred_fallthru
      _
  $region6: #{rnn_sequence.1} parent=0 // loop_footer
    %s17 = sadd.s32 1, %s13
  $region7: #{rnn_sequence.1} parent=0 // loop_footer_branch
    %12 = sbr.rel target = $region3
  $region8: #{rnn_sequence.1} parent=0 // loop_exit
    _
  %1240 = vsyncmov [#allocation6]
  %s1241 = vpop.sfrf %1240
  %p1242 = scmp.eq.s32.totalorder %s1241, 0
  %p1243 = pneg %p1242
  %1245 = shalt.err (%p1243)
  %s1246 = scalar_lea.sflag [#allocation6], 1
  %1247 = vsyncmov %s1246
  %s1248 = vpop.sfrf %1247
  %p1249 = scmp.eq.s32.totalorder %s1248, 0
  %p1250 = pneg %p1249
  %1252 = shalt.err (%p1250)
  %s1253 = scalar_lea.sflag [#allocation6], 2
  %1254 = vsyncmov %s1253
  %s1255 = vpop.sfrf %1254
  %p1256 = scmp.eq.s32.totalorder %s1255, 0
  %p1257 = pneg %p1256
  %1259 = shalt.err (%p1257)
  %s1260 = scalar_lea.sflag [#allocation6], 3
  %1261 = vsyncmov %s1260
  %s1262 = vpop.sfrf %1261
  %p1263 = scmp.eq.s32.totalorder %s1262, 0
  %p1264 = pneg %p1263
  %1266 = shalt.err (%p1264)

</llo_original>
